<compile_context>
chip_gen: v7x
topology: tpu7x:2x2x1
jax: 0.10.0
libtpu: 0.0.40
codegen_flags: <defaults>
</compile_context>

<pallas_src>
import functools

import numpy as np
import jax
import jax.numpy as jnp
from jax.experimental import pallas as pl
from jax.experimental.pallas import tpu as pltpu


# --------------------------------------------------------------------------
# Deterministic filter weights (replicates CannyFilter.__init__).
# With mu=0 the normalized 3x3 gaussian is exactly outer(g1d, g1d); the sobel
# kernel is exactly [0.5,1,0.5]^T x [-1,0,1] (and its transpose for sobel_y).
# --------------------------------------------------------------------------
_g1d = np.exp(-(np.linspace(-1.0, 1.0, 3) ** 2) / 2.0)
_g1d = _g1d / _g1d.sum()
_G0, _G1 = float(_g1d[0]), float(_g1d[1])

# 8 directional "thin" kernels == center minus the 8-neighbour at angle i*45deg
# (analytic replication of the cv2.getRotationMatrix2D + warpAffine result).
_THIN_OFFSETS = [(0, 1), (-1, 1), (-1, 0), (-1, -1),
                 (0, -1), (1, -1), (1, 0), (1, 1)]      # (drow, dcol), 0..315 deg

# tan((2k+1)*pi/16) thresholds: compare-based replication of
# round(atan(gy/gx)*8/pi + 4) % 8  (the reference's orientation bucket).
_T1 = float(np.tan(1.0 * np.pi / 16.0))
_T3 = float(np.tan(3.0 * np.pi / 16.0))
_T5 = float(np.tan(5.0 * np.pi / 16.0))
_T7 = float(np.tan(7.0 * np.pi / 16.0))

# TODO(synk): the hysteresis 3x3 conv (all 1.25) is only used in the optional
# thresholded branch (low/high thresholds); the default forward path
# (thresholds=None) never exercises it, so it is not implemented here.


def _ceil128(n):
    return ((n + 127) // 128) * 128


# --------------------------------------------------------------------------
# Fused kernel: gaussian blur + sobel + magnitude + orientation bucket + NMS.
# One batch item per grid step.
# --------------------------------------------------------------------------
def _canny_fused_kernel(img_ref, blur_ref, gx_ref, gy_ref, mag_ref, thin_ref,
                        *, valid_w):
    # img_ref : (C, Hp, Wp)   reflect-pad-10 image,  Hp = h+20, Wp = w+20
    # blur_ref: (C, Hp, WBs)  gaussian blur, lane-padded width (mult of 128)
    # gx/gy/mag/thin_ref: (h, wL)  interior results, lane-padded width wL
    C, Hp, Wp = img_ref.shape
    WBs = blur_ref.shape[-1]                 # stored blur width (mult of 128)
    h, wL = gx_ref.shape
    w = valid_w                              # true interior width (<= wL)

    # compute width: wide enough for the stored blur AND the gradient window
    # (sobel needs blur cols 8 .. wL+11).
    WBc = _ceil128(max(Wp, wL + 12))

    inv_c = 1.0 / float(C)
    a_c = 0.5 * inv_c                        # sobel taps with 1/C folded in
    b_c = 1.0 * inv_c

    # ---- separable gaussian blur, per channel, zero 'same' boundary ---------
    s = None
    for c in range(C):
        xc = img_ref[c]                                              # (Hp, Wp)
        # zero ring (== conv2d padding=1) + lane widening, one small VMEM pad
        xcp = jnp.pad(xc, ((1, 1), (1, WBc + 1 - Wp)))               # (Hp+2, WBc+2)
        hx = _G0 * (xcp[:, 0:WBc] + xcp[:, 2:WBc + 2]) + _G1 * xcp[:, 1:WBc + 1]
        bc = _G0 * (hx[0:Hp, :] + hx[2:Hp + 2, :]) + _G1 * hx[1:Hp + 1, :]   # (Hp, WBc)
        blur_ref[c] = bc[:, :WBs]                                    # dense slab store
        s = bc if s is None else s + bc                              # channel sum

    # ---- sobel gradients on the channel sum (conv is linear) ----------------
    # extended (h+2, wL+2) window so the NMS halo comes for free.
    sw = s[8:12 + h, 8:12 + wL]                                      # (h+4, wL+4)
    hgx = sw[:, 2:wL + 4] - sw[:, 0:wL + 2]                          # (h+4, wL+2)
    gx_e = a_c * (hgx[0:h + 2, :] + hgx[2:h + 4, :]) + b_c * hgx[1:h + 3, :]
    hgy = a_c * (sw[:, 0:wL + 2] + sw[:, 2:wL + 4]) + b_c * sw[:, 1:wL + 3]
    gy_e = hgy[2:h + 4, :] - hgy[0:h + 2, :]                         # (h+2, wL+2)

    gx = gx_e[1:h + 1, 1:wL + 1]                                     # (h, wL)
    gy = gy_e[1:h + 1, 1:wL + 1]
    gx_ref[...] = gx
    gy_ref[...] = gy

    # ---- magnitude with built-in zero halo (== directional conv padding=1) --
    mag_e = jnp.sqrt(gx_e * gx_e + gy_e * gy_e)                      # (h+2, wL+2)
    row = jax.lax.broadcasted_iota(jnp.int32, (h + 2, wL + 2), 0)
    col = jax.lax.broadcasted_iota(jnp.int32, (h + 2, wL + 2), 1)
    in_img = (row >= 1) & (row <= h) & (col >= 1) & (col <= w)
    mag_h = jnp.where(in_img, mag_e, 0.0)                            # zero ring outside
    mag = mag_h[1:h + 1, 1:wL + 1]                                   # (h, wL)
    mag_ref[...] = mag

    # ---- 8-way orientation bucket mod 4, via compares (no arctan) -----------
    # Equivalent to the reference's round(atan(gy/gx)*8/pi + 4) % 8, grouped as
    # bucket mod 4 (the only thing NMS consumes).  Disagreement is possible only
    # exactly at the tan((2k+1)pi/16) boundaries (measure zero for float data).
    ax = jnp.abs(gx)
    ay = jnp.abs(gy)
    c1 = ay < _T1 * ax
    c3 = ay < _T3 * ax
    c5 = ay < _T5 * ax
    c7 = ay < _T7 * ax
    pos_t = (gx * gy) >= 0.0                       # sign of gy/gx
    o0 = c1 | (~c7)
    o2 = (~c3) & c5
    o1 = (pos_t & (~c1) & c3) | ((~pos_t) & (~c5) & c7)
    o3 = ((~pos_t) & (~c1) & c3) | (pos_t & (~c5) & c7)
    oriented = (o0, o1, o2, o3)
    # gx == gy == 0 -> reference orientation is NaN -> never oriented.
    valid_dir = (ax > 0.0) | (ay > 0.0)

    # ---- non-maximum suppression (fused; neighbours are slices of mag_h) ----
    thin = mag
    for pos_i in range(4):
        dr_p, dc_p = _THIN_OFFSETS[pos_i]
        dr_n, dc_n = _THIN_OFFSETS[pos_i + 4]
        nb_p = mag_h[1 + dr_p:1 + dr_p + h, 1 + dc_p:1 + dc_p + wL]
        nb_n = mag_h[1 + dr_n:1 + dr_n + h, 1 + dc_n:1 + dc_n + wL]
        is_max = (mag > nb_p) & (mag > nb_n)
        to_remove = valid_dir & oriented[pos_i] & (~is_max)
        thin = jnp.where(to_remove, 0.0, thin)
    thin_ref[...] = thin


# --------------------------------------------------------------------------
# Wrapper: single reflection pad, one fused pallas_call, orientation chain.
# --------------------------------------------------------------------------
def canny_forward(img):
    """img: (B, C, h, w) float32 NCHW.

    Returns (blurred, grad_x, grad_y, grad_magnitude, grad_orientation,
    thin_edges), matching CannyFilter.forward with default thresholds (None).
    """
    img = img.astype(jnp.float32)
    B, C, h, w = img.shape
    Hp, Wp = h + 20, w + 20
    wL = _ceil128(w)            # lane-dense width of the interior outputs
    WBs = _ceil128(Wp)          # lane-dense width of the stored blur

    # ReflectionPad2d(10): the only wrapper-side pad.  The gaussian 'same'
    # zero boundary and lane widening are handled inside the kernel.
    imgp = jnp.pad(img, ((0, 0), (0, 0), (10, 10), (10, 10)), mode="reflect")

    kernel = functools.partial(_canny_fused_kernel, valid_w=w)
    grad_spec = pl.BlockSpec((None, None, h, wL), lambda b: (b, 0, 0, 0))

    # TODO(synk): for large images add an H-row tile axis ("parallel") with a
    # ~14-row halo (blur+sobel+NMS) so per-step blocks fit v7x's 64 MiB VMEM,
    # both TensorCores get work at B<=2, and DMA/compute actually pipelines.
    blur_p, gx_p, gy_p, mag_p, thin_p = pl.pallas_call(
        kernel,
        out_shape=(
            jax.ShapeDtypeStruct((B, C, Hp, WBs), jnp.float32),
            jax.ShapeDtypeStruct((B, 1, h, wL), jnp.float32),
            jax.ShapeDtypeStruct((B, 1, h, wL), jnp.float32),
            jax.ShapeDtypeStruct((B, 1, h, wL), jnp.float32),
            jax.ShapeDtypeStruct((B, 1, h, wL), jnp.float32),
        ),
        grid=(B,),
        in_specs=[pl.BlockSpec((None, C, Hp, Wp), lambda b: (b, 0, 0, 0))],
        out_specs=(
            pl.BlockSpec((None, C, Hp, WBs), lambda b: (b, 0, 0, 0)),
            grad_spec, grad_spec, grad_spec, grad_spec,
        ),
        compiler_params=pltpu.CompilerParams(
            dimension_semantics=("parallel",),
            vmem_limit_bytes=64 * 1024 * 1024,
        ),
    )(imgp)

    # crop the lane padding back to the reference shapes (single XLA slice each)
    blurred = blur_p[..., :Wp]
    grad_x = gx_p[..., :w]
    grad_y = gy_p[..., :w]
    grad_magnitude = mag_p[..., :w]
    thin_edges = thin_p[..., :w]

    # TODO(synk): arctan has no guaranteed Mosaic lowering; the orientation
    # chain (returned tensor only) stays in plain JAX glue, exact reference math.
    grad_orientation = jnp.arctan(grad_y / grad_x)
    grad_orientation = grad_orientation * (360.0 / np.pi) + 180.0
    grad_orientation = jnp.round(grad_orientation / 45.0) * 45.0

    return blurred, grad_x, grad_y, grad_magnitude, grad_orientation, thin_edges


if __name__ == "__main__":
    key = jax.random.PRNGKey(0)
    x = jax.random.uniform(key, (2, 4, 16, 16), dtype=jnp.float32)
    fwd = jax.jit(canny_forward)
    outs = fwd(x)
    outs = jax.block_until_ready(outs)
    print("KERNEL_OK")
</pallas_src>

<mosaic_0001>
module attributes {stable_mosaic.version = 11 : i64} {
  func.func @_canny_fused_kernel(%arg0: i32, %arg1: memref<1x4x36x36xf32, #tpu.memory_space<vmem>>, %arg2: memref<1x4x36x128xf32, #tpu.memory_space<vmem>>, %arg3: memref<1x1x16x128xf32, #tpu.memory_space<vmem>>, %arg4: memref<1x1x16x128xf32, #tpu.memory_space<vmem>>, %arg5: memref<1x1x16x128xf32, #tpu.memory_space<vmem>>, %arg6: memref<1x1x16x128xf32, #tpu.memory_space<vmem>>) attributes {dimension_semantics = [#tpu.dimension_semantics<parallel>], iteration_bounds = array<i64: 2>, scalar_prefetch = 0 : i64, scratch_operands = 0 : i64, tpu.core_type = #tpu.core_type<tc>, window_params = [{transform_indices = @transform_0, window_bounds = array<i64: 1, 4, 36, 36>}, {transform_indices = @transform_1, window_bounds = array<i64: 1, 4, 36, 128>}, {transform_indices = @transform_2, window_bounds = array<i64: 1, 1, 16, 128>}, {transform_indices = @transform_3, window_bounds = array<i64: 1, 1, 16, 128>}, {transform_indices = @transform_4, window_bounds = array<i64: 1, 1, 16, 128>}, {transform_indices = @transform_5, window_bounds = array<i64: 1, 1, 16, 128>}]} {
    %c0 = arith.constant 0 : index
    %c0_0 = arith.constant 0 : index
    %c0_1 = arith.constant 0 : index
    %c0_2 = arith.constant 0 : index
    %0 = vector.load %arg1[%c0, %c0_0, %c0_1, %c0_2] : memref<1x4x36x36xf32, #tpu.memory_space<vmem>>, vector<1x1x36x36xf32>
    %1 = vector.shape_cast %0 : vector<1x1x36x36xf32> to vector<36x36xf32>
    %c0_i32 = arith.constant 0 : i32
    %2 = arith.sitofp %c0_i32 : i32 to f32
    %3 = vector.broadcast %2 : f32 to vector<1x36xf32>
    %4 = tpu.concatenate %3, %1 in 0 : vector<1x36xf32>, vector<36x36xf32> -> vector<37x36xf32>
    %5 = vector.broadcast %2 : f32 to vector<1x36xf32>
    %6 = tpu.concatenate %4, %5 in 0 : vector<37x36xf32>, vector<1x36xf32> -> vector<38x36xf32>
    %7 = vector.broadcast %2 : f32 to vector<38x1xf32>
    %8 = tpu.concatenate %7, %6 in 1 : vector<38x1xf32>, vector<38x36xf32> -> vector<38x37xf32>
    %9 = vector.broadcast %2 : f32 to vector<38x221xf32>
    %10 = tpu.concatenate %8, %9 in 1 : vector<38x37xf32>, vector<38x221xf32> -> vector<38x258xf32>
    %11 = vector.extract_strided_slice %10 {offsets = [0, 0], sizes = [38, 256], strides = [1, 1]} : vector<38x258xf32> to vector<38x256xf32>
    %12 = vector.extract_strided_slice %10 {offsets = [0, 2], sizes = [38, 256], strides = [1, 1]} : vector<38x258xf32> to vector<38x256xf32>
    %13 = arith.addf %11, %12 : vector<38x256xf32>
    %cst = arith.constant 0.274068624 : f32
    %14 = vector.broadcast %cst : f32 to vector<38x256xf32>
    %15 = arith.mulf %14, %13 : vector<38x256xf32>
    %16 = vector.extract_strided_slice %10 {offsets = [0, 1], sizes = [38, 256], strides = [1, 1]} : vector<38x258xf32> to vector<38x256xf32>
    %cst_3 = arith.constant 0.451862752 : f32
    %17 = vector.broadcast %cst_3 : f32 to vector<38x256xf32>
    %18 = arith.mulf %17, %16 : vector<38x256xf32>
    %19 = arith.addf %15, %18 : vector<38x256xf32>
    %20 = vector.extract_strided_slice %19 {offsets = [0, 0], sizes = [36, 256], strides = [1, 1]} : vector<38x256xf32> to vector<36x256xf32>
    %21 = vector.extract_strided_slice %19 {offsets = [2, 0], sizes = [36, 256], strides = [1, 1]} : vector<38x256xf32> to vector<36x256xf32>
    %22 = arith.addf %20, %21 : vector<36x256xf32>
    %cst_4 = arith.constant 0.274068624 : f32
    %23 = vector.broadcast %cst_4 : f32 to vector<36x256xf32>
    %24 = arith.mulf %23, %22 : vector<36x256xf32>
    %25 = vector.extract_strided_slice %19 {offsets = [1, 0], sizes = [36, 256], strides = [1, 1]} : vector<38x256xf32> to vector<36x256xf32>
    %cst_5 = arith.constant 0.451862752 : f32
    %26 = vector.broadcast %cst_5 : f32 to vector<36x256xf32>
    %27 = arith.mulf %26, %25 : vector<36x256xf32>
    %28 = arith.addf %24, %27 : vector<36x256xf32>
    %29 = vector.extract_strided_slice %28 {offsets = [0, 0], sizes = [36, 128], strides = [1, 1]} : vector<36x256xf32> to vector<36x128xf32>
    %c0_6 = arith.constant 0 : index
    %c0_7 = arith.constant 0 : index
    %c0_8 = arith.constant 0 : index
    %c0_9 = arith.constant 0 : index
    %30 = vector.load %arg2[%c0_6, %c0_7, %c0_8, %c0_9] : memref<1x4x36x128xf32, #tpu.memory_space<vmem>>, vector<1x1x36x128xf32>
    %31 = vector.shape_cast %30 : vector<1x1x36x128xf32> to vector<36x128xf32>
    %32 = vector.shape_cast %29 : vector<36x128xf32> to vector<1x1x36x128xf32>
    tpu.vector_store %arg2[%c0_6, %c0_7, %c0_8, %c0_9], %32 {strides = array<i32>} : memref<1x4x36x128xf32, #tpu.memory_space<vmem>>, vector<1x1x36x128xf32>,
    %c0_10 = arith.constant 0 : index
    %c1 = arith.constant 1 : index
    %c0_11 = arith.constant 0 : index
    %c0_12 = arith.constant 0 : index
    %33 = vector.load %arg1[%c0_10, %c1, %c0_11, %c0_12] : memref<1x4x36x36xf32, #tpu.memory_space<vmem>>, vector<1x1x36x36xf32>
    %34 = vector.shape_cast %33 : vector<1x1x36x36xf32> to vector<36x36xf32>
    %c0_i32_13 = arith.constant 0 : i32
    %35 = arith.sitofp %c0_i32_13 : i32 to f32
    %36 = vector.broadcast %35 : f32 to vector<1x36xf32>
    %37 = tpu.concatenate %36, %34 in 0 : vector<1x36xf32>, vector<36x36xf32> -> vector<37x36xf32>
    %38 = vector.broadcast %35 : f32 to vector<1x36xf32>
    %39 = tpu.concatenate %37, %38 in 0 : vector<37x36xf32>, vector<1x36xf32> -> vector<38x36xf32>
    %40 = vector.broadcast %35 : f32 to vector<38x1xf32>
    %41 = tpu.concatenate %40, %39 in 1 : vector<38x1xf32>, vector<38x36xf32> -> vector<38x37xf32>
    %42 = vector.broadcast %35 : f32 to vector<38x221xf32>
    %43 = tpu.concatenate %41, %42 in 1 : vector<38x37xf32>, vector<38x221xf32> -> vector<38x258xf32>
    %44 = vector.extract_strided_slice %43 {offsets = [0, 0], sizes = [38, 256], strides = [1, 1]} : vector<38x258xf32> to vector<38x256xf32>
    %45 = vector.extract_strided_slice %43 {offsets = [0, 2], sizes = [38, 256], strides = [1, 1]} : vector<38x258xf32> to vector<38x256xf32>
    %46 = arith.addf %44, %45 : vector<38x256xf32>
    %cst_14 = arith.constant 0.274068624 : f32
    %47 = vector.broadcast %cst_14 : f32 to vector<38x256xf32>
    %48 = arith.mulf %47, %46 : vector<38x256xf32>
    %49 = vector.extract_strided_slice %43 {offsets = [0, 1], sizes = [38, 256], strides = [1, 1]} : vector<38x258xf32> to vector<38x256xf32>
    %cst_15 = arith.constant 0.451862752 : f32
    %50 = vector.broadcast %cst_15 : f32 to vector<38x256xf32>
    %51 = arith.mulf %50, %49 : vector<38x256xf32>
    %52 = arith.addf %48, %51 : vector<38x256xf32>
    %53 = vector.extract_strided_slice %52 {offsets = [0, 0], sizes = [36, 256], strides = [1, 1]} : vector<38x256xf32> to vector<36x256xf32>
    %54 = vector.extract_strided_slice %52 {offsets = [2, 0], sizes = [36, 256], strides = [1, 1]} : vector<38x256xf32> to vector<36x256xf32>
    %55 = arith.addf %53, %54 : vector<36x256xf32>
    %cst_16 = arith.constant 0.274068624 : f32
    %56 = vector.broadcast %cst_16 : f32 to vector<36x256xf32>
    %57 = arith.mulf %56, %55 : vector<36x256xf32>
    %58 = vector.extract_strided_slice %52 {offsets = [1, 0], sizes = [36, 256], strides = [1, 1]} : vector<38x256xf32> to vector<36x256xf32>
    %cst_17 = arith.constant 0.451862752 : f32
    %59 = vector.broadcast %cst_17 : f32 to vector<36x256xf32>
    %60 = arith.mulf %59, %58 : vector<36x256xf32>
    %61 = arith.addf %57, %60 : vector<36x256xf32>
    %62 = vector.extract_strided_slice %61 {offsets = [0, 0], sizes = [36, 128], strides = [1, 1]} : vector<36x256xf32> to vector<36x128xf32>
    %c0_18 = arith.constant 0 : index
    %c1_19 = arith.constant 1 : index
    %c0_20 = arith.constant 0 : index
    %c0_21 = arith.constant 0 : index
    %63 = vector.load %arg2[%c0_18, %c1_19, %c0_20, %c0_21] : memref<1x4x36x128xf32, #tpu.memory_space<vmem>>, vector<1x1x36x128xf32>
    %64 = vector.shape_cast %63 : vector<1x1x36x128xf32> to vector<36x128xf32>
    %65 = vector.shape_cast %62 : vector<36x128xf32> to vector<1x1x36x128xf32>
    tpu.vector_store %arg2[%c0_18, %c1_19, %c0_20, %c0_21], %65 {strides = array<i32>} : memref<1x4x36x128xf32, #tpu.memory_space<vmem>>, vector<1x1x36x128xf32>,
    %66 = arith.addf %28, %61 : vector<36x256xf32>
    %c0_22 = arith.constant 0 : index
    %c2 = arith.constant 2 : index
    %c0_23 = arith.constant 0 : index
    %c0_24 = arith.constant 0 : index
    %67 = vector.load %arg1[%c0_22, %c2, %c0_23, %c0_24] : memref<1x4x36x36xf32, #tpu.memory_space<vmem>>, vector<1x1x36x36xf32>
    %68 = vector.shape_cast %67 : vector<1x1x36x36xf32> to vector<36x36xf32>
    %c0_i32_25 = arith.constant 0 : i32
    %69 = arith.sitofp %c0_i32_25 : i32 to f32
    %70 = vector.broadcast %69 : f32 to vector<1x36xf32>
    %71 = tpu.concatenate %70, %68 in 0 : vector<1x36xf32>, vector<36x36xf32> -> vector<37x36xf32>
    %72 = vector.broadcast %69 : f32 to vector<1x36xf32>
    %73 = tpu.concatenate %71, %72 in 0 : vector<37x36xf32>, vector<1x36xf32> -> vector<38x36xf32>
    %74 = vector.broadcast %69 : f32 to vector<38x1xf32>
    %75 = tpu.concatenate %74, %73 in 1 : vector<38x1xf32>, vector<38x36xf32> -> vector<38x37xf32>
    %76 = vector.broadcast %69 : f32 to vector<38x221xf32>
    %77 = tpu.concatenate %75, %76 in 1 : vector<38x37xf32>, vector<38x221xf32> -> vector<38x258xf32>
    %78 = vector.extract_strided_slice %77 {offsets = [0, 0], sizes = [38, 256], strides = [1, 1]} : vector<38x258xf32> to vector<38x256xf32>
    %79 = vector.extract_strided_slice %77 {offsets = [0, 2], sizes = [38, 256], strides = [1, 1]} : vector<38x258xf32> to vector<38x256xf32>
    %80 = arith.addf %78, %79 : vector<38x256xf32>
    %cst_26 = arith.constant 0.274068624 : f32
    %81 = vector.broadcast %cst_26 : f32 to vector<38x256xf32>
    %82 = arith.mulf %81, %80 : vector<38x256xf32>
    %83 = vector.extract_strided_slice %77 {offsets = [0, 1], sizes = [38, 256], strides = [1, 1]} : vector<38x258xf32> to vector<38x256xf32>
    %cst_27 = arith.constant 0.451862752 : f32
    %84 = vector.broadcast %cst_27 : f32 to vector<38x256xf32>
    %85 = arith.mulf %84, %83 : vector<38x256xf32>
    %86 = arith.addf %82, %85 : vector<38x256xf32>
    %87 = vector.extract_strided_slice %86 {offsets = [0, 0], sizes = [36, 256], strides = [1, 1]} : vector<38x256xf32> to vector<36x256xf32>
    %88 = vector.extract_strided_slice %86 {offsets = [2, 0], sizes = [36, 256], strides = [1, 1]} : vector<38x256xf32> to vector<36x256xf32>
    %89 = arith.addf %87, %88 : vector<36x256xf32>
    %cst_28 = arith.constant 0.274068624 : f32
    %90 = vector.broadcast %cst_28 : f32 to vector<36x256xf32>
    %91 = arith.mulf %90, %89 : vector<36x256xf32>
    %92 = vector.extract_strided_slice %86 {offsets = [1, 0], sizes = [36, 256], strides = [1, 1]} : vector<38x256xf32> to vector<36x256xf32>
    %cst_29 = arith.constant 0.451862752 : f32
    %93 = vector.broadcast %cst_29 : f32 to vector<36x256xf32>
    %94 = arith.mulf %93, %92 : vector<36x256xf32>
    %95 = arith.addf %91, %94 : vector<36x256xf32>
    %96 = vector.extract_strided_slice %95 {offsets = [0, 0], sizes = [36, 128], strides = [1, 1]} : vector<36x256xf32> to vector<36x128xf32>
    %c0_30 = arith.constant 0 : index
    %c2_31 = arith.constant 2 : index
    %c0_32 = arith.constant 0 : index
    %c0_33 = arith.constant 0 : index
    %97 = vector.load %arg2[%c0_30, %c2_31, %c0_32, %c0_33] : memref<1x4x36x128xf32, #tpu.memory_space<vmem>>, vector<1x1x36x128xf32>
    %98 = vector.shape_cast %97 : vector<1x1x36x128xf32> to vector<36x128xf32>
    %99 = vector.shape_cast %96 : vector<36x128xf32> to vector<1x1x36x128xf32>
    tpu.vector_store %arg2[%c0_30, %c2_31, %c0_32, %c0_33], %99 {strides = array<i32>} : memref<1x4x36x128xf32, #tpu.memory_space<vmem>>, vector<1x1x36x128xf32>,
    %100 = arith.addf %66, %95 : vector<36x256xf32>
    %c0_34 = arith.constant 0 : index
    %c3 = arith.constant 3 : index
    %c0_35 = arith.constant 0 : index
    %c0_36 = arith.constant 0 : index
    %101 = vector.load %arg1[%c0_34, %c3, %c0_35, %c0_36] : memref<1x4x36x36xf32, #tpu.memory_space<vmem>>, vector<1x1x36x36xf32>
    %102 = vector.shape_cast %101 : vector<1x1x36x36xf32> to vector<36x36xf32>
    %c0_i32_37 = arith.constant 0 : i32
    %103 = arith.sitofp %c0_i32_37 : i32 to f32
    %104 = vector.broadcast %103 : f32 to vector<1x36xf32>
    %105 = tpu.concatenate %104, %102 in 0 : vector<1x36xf32>, vector<36x36xf32> -> vector<37x36xf32>
    %106 = vector.broadcast %103 : f32 to vector<1x36xf32>
    %107 = tpu.concatenate %105, %106 in 0 : vector<37x36xf32>, vector<1x36xf32> -> vector<38x36xf32>
    %108 = vector.broadcast %103 : f32 to vector<38x1xf32>
    %109 = tpu.concatenate %108, %107 in 1 : vector<38x1xf32>, vector<38x36xf32> -> vector<38x37xf32>
    %110 = vector.broadcast %103 : f32 to vector<38x221xf32>
    %111 = tpu.concatenate %109, %110 in 1 : vector<38x37xf32>, vector<38x221xf32> -> vector<38x258xf32>
    %112 = vector.extract_strided_slice %111 {offsets = [0, 0], sizes = [38, 256], strides = [1, 1]} : vector<38x258xf32> to vector<38x256xf32>
    %113 = vector.extract_strided_slice %111 {offsets = [0, 2], sizes = [38, 256], strides = [1, 1]} : vector<38x258xf32> to vector<38x256xf32>
    %114 = arith.addf %112, %113 : vector<38x256xf32>
    %cst_38 = arith.constant 0.274068624 : f32
    %115 = vector.broadcast %cst_38 : f32 to vector<38x256xf32>
    %116 = arith.mulf %115, %114 : vector<38x256xf32>
    %117 = vector.extract_strided_slice %111 {offsets = [0, 1], sizes = [38, 256], strides = [1, 1]} : vector<38x258xf32> to vector<38x256xf32>
    %cst_39 = arith.constant 0.451862752 : f32
    %118 = vector.broadcast %cst_39 : f32 to vector<38x256xf32>
    %119 = arith.mulf %118, %117 : vector<38x256xf32>
    %120 = arith.addf %116, %119 : vector<38x256xf32>
    %121 = vector.extract_strided_slice %120 {offsets = [0, 0], sizes = [36, 256], strides = [1, 1]} : vector<38x256xf32> to vector<36x256xf32>
    %122 = vector.extract_strided_slice %120 {offsets = [2, 0], sizes = [36, 256], strides = [1, 1]} : vector<38x256xf32> to vector<36x256xf32>
    %123 = arith.addf %121, %122 : vector<36x256xf32>
    %cst_40 = arith.constant 0.274068624 : f32
    %124 = vector.broadcast %cst_40 : f32 to vector<36x256xf32>
    %125 = arith.mulf %124, %123 : vector<36x256xf32>
    %126 = vector.extract_strided_slice %120 {offsets = [1, 0], sizes = [36, 256], strides = [1, 1]} : vector<38x256xf32> to vector<36x256xf32>
    %cst_41 = arith.constant 0.451862752 : f32
    %127 = vector.broadcast %cst_41 : f32 to vector<36x256xf32>
    %128 = arith.mulf %127, %126 : vector<36x256xf32>
    %129 = arith.addf %125, %128 : vector<36x256xf32>
    %130 = vector.extract_strided_slice %129 {offsets = [0, 0], sizes = [36, 128], strides = [1, 1]} : vector<36x256xf32> to vector<36x128xf32>
    %c0_42 = arith.constant 0 : index
    %c3_43 = arith.constant 3 : index
    %c0_44 = arith.constant 0 : index
    %c0_45 = arith.constant 0 : index
    %131 = vector.load %arg2[%c0_42, %c3_43, %c0_44, %c0_45] : memref<1x4x36x128xf32, #tpu.memory_space<vmem>>, vector<1x1x36x128xf32>
    %132 = vector.shape_cast %131 : vector<1x1x36x128xf32> to vector<36x128xf32>
    %133 = vector.shape_cast %130 : vector<36x128xf32> to vector<1x1x36x128xf32>
    tpu.vector_store %arg2[%c0_42, %c3_43, %c0_44, %c0_45], %133 {strides = array<i32>} : memref<1x4x36x128xf32, #tpu.memory_space<vmem>>, vector<1x1x36x128xf32>,
    %134 = arith.addf %100, %129 : vector<36x256xf32>
    %135 = vector.extract_strided_slice %134 {offsets = [8, 8], sizes = [20, 132], strides = [1, 1]} : vector<36x256xf32> to vector<20x132xf32>
    %136 = vector.extract_strided_slice %135 {offsets = [0, 2], sizes = [20, 130], strides = [1, 1]} : vector<20x132xf32> to vector<20x130xf32>
    %137 = vector.extract_strided_slice %135 {offsets = [0, 0], sizes = [20, 130], strides = [1, 1]} : vector<20x132xf32> to vector<20x130xf32>
    %138 = arith.subf %136, %137 : vector<20x130xf32>
    %139 = vector.extract_strided_slice %138 {offsets = [0, 0], sizes = [18, 130], strides = [1, 1]} : vector<20x130xf32> to vector<18x130xf32>
    %140 = vector.extract_strided_slice %138 {offsets = [2, 0], sizes = [18, 130], strides = [1, 1]} : vector<20x130xf32> to vector<18x130xf32>
    %141 = arith.addf %139, %140 : vector<18x130xf32>
    %cst_46 = arith.constant 1.250000e-01 : f32
    %142 = vector.broadcast %cst_46 : f32 to vector<18x130xf32>
    %143 = arith.mulf %142, %141 : vector<18x130xf32>
    %144 = vector.extract_strided_slice %138 {offsets = [1, 0], sizes = [18, 130], strides = [1, 1]} : vector<20x130xf32> to vector<18x130xf32>
    %cst_47 = arith.constant 2.500000e-01 : f32
    %145 = vector.broadcast %cst_47 : f32 to vector<18x130xf32>
    %146 = arith.mulf %145, %144 : vector<18x130xf32>
    %147 = arith.addf %143, %146 : vector<18x130xf32>
    %148 = vector.extract_strided_slice %135 {offsets = [0, 0], sizes = [20, 130], strides = [1, 1]} : vector<20x132xf32> to vector<20x130xf32>
    %149 = vector.extract_strided_slice %135 {offsets = [0, 2], sizes = [20, 130], strides = [1, 1]} : vector<20x132xf32> to vector<20x130xf32>
    %150 = arith.addf %148, %149 : vector<20x130xf32>
    %cst_48 = arith.constant 1.250000e-01 : f32
    %151 = vector.broadcast %cst_48 : f32 to vector<20x130xf32>
    %152 = arith.mulf %151, %150 : vector<20x130xf32>
    %153 = vector.extract_strided_slice %135 {offsets = [0, 1], sizes = [20, 130], strides = [1, 1]} : vector<20x132xf32> to vector<20x130xf32>
    %cst_49 = arith.constant 2.500000e-01 : f32
    %154 = vector.broadcast %cst_49 : f32 to vector<20x130xf32>
    %155 = arith.mulf %154, %153 : vector<20x130xf32>
    %156 = arith.addf %152, %155 : vector<20x130xf32>
    %157 = vector.extract_strided_slice %156 {offsets = [2, 0], sizes = [18, 130], strides = [1, 1]} : vector<20x130xf32> to vector<18x130xf32>
    %158 = vector.extract_strided_slice %156 {offsets = [0, 0], sizes = [18, 130], strides = [1, 1]} : vector<20x130xf32> to vector<18x130xf32>
    %159 = arith.subf %157, %158 : vector<18x130xf32>
    %160 = vector.extract_strided_slice %147 {offsets = [1, 1], sizes = [16, 128], strides = [1, 1]} : vector<18x130xf32> to vector<16x128xf32>
    %161 = vector.extract_strided_slice %159 {offsets = [1, 1], sizes = [16, 128], strides = [1, 1]} : vector<18x130xf32> to vector<16x128xf32>
    %c0_50 = arith.constant 0 : index
    %c0_51 = arith.constant 0 : index
    %c0_52 = arith.constant 0 : index
    %c0_53 = arith.constant 0 : index
    %162 = vector.load %arg3[%c0_50, %c0_51, %c0_52, %c0_53] : memref<1x1x16x128xf32, #tpu.memory_space<vmem>>, vector<1x1x16x128xf32>
    %163 = vector.shape_cast %162 : vector<1x1x16x128xf32> to vector<16x128xf32>
    %164 = vector.shape_cast %160 : vector<16x128xf32> to vector<1x1x16x128xf32>
    tpu.vector_store %arg3[%c0_50, %c0_51, %c0_52, %c0_53], %164 {strides = array<i32>} : memref<1x1x16x128xf32, #tpu.memory_space<vmem>>, vector<1x1x16x128xf32>,
    %c0_54 = arith.constant 0 : index
    %c0_55 = arith.constant 0 : index
    %c0_56 = arith.constant 0 : index
    %c0_57 = arith.constant 0 : index
    %165 = vector.load %arg4[%c0_54, %c0_55, %c0_56, %c0_57] : memref<1x1x16x128xf32, #tpu.memory_space<vmem>>, vector<1x1x16x128xf32>
    %166 = vector.shape_cast %165 : vector<1x1x16x128xf32> to vector<16x128xf32>
    %167 = vector.shape_cast %161 : vector<16x128xf32> to vector<1x1x16x128xf32>
    tpu.vector_store %arg4[%c0_54, %c0_55, %c0_56, %c0_57], %167 {strides = array<i32>} : memref<1x1x16x128xf32, #tpu.memory_space<vmem>>, vector<1x1x16x128xf32>,
    %168 = arith.mulf %147, %147 : vector<18x130xf32>
    %169 = arith.mulf %159, %159 : vector<18x130xf32>
    %170 = arith.addf %168, %169 : vector<18x130xf32>
    %171 = math.sqrt %170 : vector<18x130xf32>
    %172 = tpu.iota {dimensions = array<i32: 0>} : vector<18x130xi32>
    %173 = tpu.iota {dimensions = array<i32: 1>} : vector<18x130xi32>
    %c1_i32 = arith.constant 1 : i32
    %174 = vector.broadcast %c1_i32 : i32 to vector<18x130xi32>
    %175 = arith.cmpi sge, %172, %174 : vector<18x130xi32>
    %c16_i32 = arith.constant 16 : i32
    %176 = vector.broadcast %c16_i32 : i32 to vector<18x130xi32>
    %177 = arith.cmpi sle, %172, %176 : vector<18x130xi32>
    %178 = arith.andi %175, %177 : vector<18x130xi1>
    %c1_i32_58 = arith.constant 1 : i32
    %179 = vector.broadcast %c1_i32_58 : i32 to vector<18x130xi32>
    %180 = arith.cmpi sge, %173, %179 : vector<18x130xi32>
    %181 = arith.andi %178, %180 : vector<18x130xi1>
    %c16_i32_59 = arith.constant 16 : i32
    %182 = vector.broadcast %c16_i32_59 : i32 to vector<18x130xi32>
    %183 = arith.cmpi sle, %173, %182 : vector<18x130xi32>
    %184 = arith.andi %181, %183 : vector<18x130xi1>
    %cst_60 = arith.constant 0.000000e+00 : f32
    %185 = vector.broadcast %cst_60 : f32 to vector<18x130xf32>
    %186 = arith.select %184, %171, %185 : vector<18x130xi1>, vector<18x130xf32>
    %187 = vector.extract_strided_slice %186 {offsets = [1, 1], sizes = [16, 128], strides = [1, 1]} : vector<18x130xf32> to vector<16x128xf32>
    %c0_61 = arith.constant 0 : index
    %c0_62 = arith.constant 0 : index
    %c0_63 = arith.constant 0 : index
    %c0_64 = arith.constant 0 : index
    %188 = vector.load %arg5[%c0_61, %c0_62, %c0_63, %c0_64] : memref<1x1x16x128xf32, #tpu.memory_space<vmem>>, vector<1x1x16x128xf32>
    %189 = vector.shape_cast %188 : vector<1x1x16x128xf32> to vector<16x128xf32>
    %190 = vector.shape_cast %187 : vector<16x128xf32> to vector<1x1x16x128xf32>
    tpu.vector_store %arg5[%c0_61, %c0_62, %c0_63, %c0_64], %190 {strides = array<i32>} : memref<1x1x16x128xf32, #tpu.memory_space<vmem>>, vector<1x1x16x128xf32>,
    %191 = math.absf %160 : vector<16x128xf32>
    %192 = math.absf %161 : vector<16x128xf32>
    %cst_65 = arith.constant 0.198912367 : f32
    %193 = vector.broadcast %cst_65 : f32 to vector<16x128xf32>
    %194 = arith.mulf %193, %191 : vector<16x128xf32>
    %195 = arith.cmpf olt, %192, %194 : vector<16x128xf32>
    %cst_66 = arith.constant 0.668178617 : f32
    %196 = vector.broadcast %cst_66 : f32 to vector<16x128xf32>
    %197 = arith.mulf %196, %191 : vector<16x128xf32>
    %198 = arith.cmpf olt, %192, %197 : vector<16x128xf32>
    %cst_67 = arith.constant 1.49660575 : f32
    %199 = vector.broadcast %cst_67 : f32 to vector<16x128xf32>
    %200 = arith.mulf %199, %191 : vector<16x128xf32>
    %201 = arith.cmpf olt, %192, %200 : vector<16x128xf32>
    %cst_68 = arith.constant 5.02733946 : f32
    %202 = vector.broadcast %cst_68 : f32 to vector<16x128xf32>
    %203 = arith.mulf %202, %191 : vector<16x128xf32>
    %204 = arith.cmpf olt, %192, %203 : vector<16x128xf32>
    %205 = arith.mulf %160, %161 : vector<16x128xf32>
    %cst_69 = arith.constant 0.000000e+00 : f32
    %206 = vector.broadcast %cst_69 : f32 to vector<16x128xf32>
    %207 = arith.cmpf oge, %205, %206 : vector<16x128xf32>
    %cst_70 = arith.constant dense<true> : vector<16x128xi1>
    %208 = arith.xori %204, %cst_70 : vector<16x128xi1>
    %209 = arith.ori %195, %208 : vector<16x128xi1>
    %cst_71 = arith.constant dense<true> : vector<16x128xi1>
    %210 = arith.xori %198, %cst_71 : vector<16x128xi1>
    %211 = arith.andi %210, %201 : vector<16x128xi1>
    %cst_72 = arith.constant dense<true> : vector<16x128xi1>
    %212 = arith.xori %195, %cst_72 : vector<16x128xi1>
    %213 = arith.andi %207, %212 : vector<16x128xi1>
    %214 = arith.andi %213, %198 : vector<16x128xi1>
    %cst_73 = arith.constant dense<true> : vector<16x128xi1>
    %215 = arith.xori %207, %cst_73 : vector<16x128xi1>
    %cst_74 = arith.constant dense<true> : vector<16x128xi1>
    %216 = arith.xori %201, %cst_74 : vector<16x128xi1>
    %217 = arith.andi %215, %216 : vector<16x128xi1>
    %218 = arith.andi %217, %204 : vector<16x128xi1>
    %219 = arith.ori %214, %218 : vector<16x128xi1>
    %cst_75 = arith.constant dense<true> : vector<16x128xi1>
    %220 = arith.xori %207, %cst_75 : vector<16x128xi1>
    %cst_76 = arith.constant dense<true> : vector<16x128xi1>
    %221 = arith.xori %195, %cst_76 : vector<16x128xi1>
    %222 = arith.andi %220, %221 : vector<16x128xi1>
    %223 = arith.andi %222, %198 : vector<16x128xi1>
    %cst_77 = arith.constant dense<true> : vector<16x128xi1>
    %224 = arith.xori %201, %cst_77 : vector<16x128xi1>
    %225 = arith.andi %207, %224 : vector<16x128xi1>
    %226 = arith.andi %225, %204 : vector<16x128xi1>
    %227 = arith.ori %223, %226 : vector<16x128xi1>
    %cst_78 = arith.constant 0.000000e+00 : f32
    %228 = vector.broadcast %cst_78 : f32 to vector<16x128xf32>
    %229 = arith.cmpf ogt, %191, %228 : vector<16x128xf32>
    %cst_79 = arith.constant 0.000000e+00 : f32
    %230 = vector.broadcast %cst_79 : f32 to vector<16x128xf32>
    %231 = arith.cmpf ogt, %192, %230 : vector<16x128xf32>
    %232 = arith.ori %229, %231 : vector<16x128xi1>
    %233 = vector.extract_strided_slice %186 {offsets = [1, 2], sizes = [16, 128], strides = [1, 1]} : vector<18x130xf32> to vector<16x128xf32>
    %234 = vector.extract_strided_slice %186 {offsets = [1, 0], sizes = [16, 128], strides = [1, 1]} : vector<18x130xf32> to vector<16x128xf32>
    %235 = arith.cmpf ogt, %187, %233 : vector<16x128xf32>
    %236 = arith.cmpf ogt, %187, %234 : vector<16x128xf32>
    %237 = arith.andi %235, %236 : vector<16x128xi1>
    %238 = arith.andi %232, %209 : vector<16x128xi1>
    %cst_80 = arith.constant dense<true> : vector<16x128xi1>
    %239 = arith.xori %237, %cst_80 : vector<16x128xi1>
    %240 = arith.andi %238, %239 : vector<16x128xi1>
    %cst_81 = arith.constant 0.000000e+00 : f32
    %241 = vector.broadcast %cst_81 : f32 to vector<16x128xf32>
    %242 = arith.select %240, %241, %187 : vector<16x128xi1>, vector<16x128xf32>
    %243 = vector.extract_strided_slice %186 {offsets = [0, 2], sizes = [16, 128], strides = [1, 1]} : vector<18x130xf32> to vector<16x128xf32>
    %244 = vector.extract_strided_slice %186 {offsets = [2, 0], sizes = [16, 128], strides = [1, 1]} : vector<18x130xf32> to vector<16x128xf32>
    %245 = arith.cmpf ogt, %187, %243 : vector<16x128xf32>
    %246 = arith.cmpf ogt, %187, %244 : vector<16x128xf32>
    %247 = arith.andi %245, %246 : vector<16x128xi1>
    %248 = arith.andi %232, %219 : vector<16x128xi1>
    %cst_82 = arith.constant dense<true> : vector<16x128xi1>
    %249 = arith.xori %247, %cst_82 : vector<16x128xi1>
    %250 = arith.andi %248, %249 : vector<16x128xi1>
    %cst_83 = arith.constant 0.000000e+00 : f32
    %251 = vector.broadcast %cst_83 : f32 to vector<16x128xf32>
    %252 = arith.select %250, %251, %242 : vector<16x128xi1>, vector<16x128xf32>
    %253 = vector.extract_strided_slice %186 {offsets = [0, 1], sizes = [16, 128], strides = [1, 1]} : vector<18x130xf32> to vector<16x128xf32>
    %254 = vector.extract_strided_slice %186 {offsets = [2, 1], sizes = [16, 128], strides = [1, 1]} : vector<18x130xf32> to vector<16x128xf32>
    %255 = arith.cmpf ogt, %187, %253 : vector<16x128xf32>
    %256 = arith.cmpf ogt, %187, %254 : vector<16x128xf32>
    %257 = arith.andi %255, %256 : vector<16x128xi1>
    %258 = arith.andi %232, %211 : vector<16x128xi1>
    %cst_84 = arith.constant dense<true> : vector<16x128xi1>
    %259 = arith.xori %257, %cst_84 : vector<16x128xi1>
    %260 = arith.andi %258, %259 : vector<16x128xi1>
    %cst_85 = arith.constant 0.000000e+00 : f32
    %261 = vector.broadcast %cst_85 : f32 to vector<16x128xf32>
    %262 = arith.select %260, %261, %252 : vector<16x128xi1>, vector<16x128xf32>
    %263 = vector.extract_strided_slice %186 {offsets = [0, 0], sizes = [16, 128], strides = [1, 1]} : vector<18x130xf32> to vector<16x128xf32>
    %264 = vector.extract_strided_slice %186 {offsets = [2, 2], sizes = [16, 128], strides = [1, 1]} : vector<18x130xf32> to vector<16x128xf32>
    %265 = arith.cmpf ogt, %187, %263 : vector<16x128xf32>
    %266 = arith.cmpf ogt, %187, %264 : vector<16x128xf32>
    %267 = arith.andi %265, %266 : vector<16x128xi1>
    %268 = arith.andi %232, %227 : vector<16x128xi1>
    %cst_86 = arith.constant dense<true> : vector<16x128xi1>
    %269 = arith.xori %267, %cst_86 : vector<16x128xi1>
    %270 = arith.andi %268, %269 : vector<16x128xi1>
    %cst_87 = arith.constant 0.000000e+00 : f32
    %271 = vector.broadcast %cst_87 : f32 to vector<16x128xf32>
    %272 = arith.select %270, %271, %262 : vector<16x128xi1>, vector<16x128xf32>
    %c0_88 = arith.constant 0 : index
    %c0_89 = arith.constant 0 : index
    %c0_90 = arith.constant 0 : index
    %c0_91 = arith.constant 0 : index
    %273 = vector.load %arg6[%c0_88, %c0_89, %c0_90, %c0_91] : memref<1x1x16x128xf32, #tpu.memory_space<vmem>>, vector<1x1x16x128xf32>
    %274 = vector.shape_cast %273 : vector<1x1x16x128xf32> to vector<16x128xf32>
    %275 = vector.shape_cast %272 : vector<16x128xf32> to vector<1x1x16x128xf32>
    tpu.vector_store %arg6[%c0_88, %c0_89, %c0_90, %c0_91], %275 {strides = array<i32>} : memref<1x1x16x128xf32, #tpu.memory_space<vmem>>, vector<1x1x16x128xf32>,
    return
  }
  func.func @transform_0(%arg0: i32) -> (i32, i32, i32, i32) {
    %c0_i32 = arith.constant 0 : i32
    %c0_i32_0 = arith.constant 0 : i32
    %c0_i32_1 = arith.constant 0 : i32
    %c0_i32_2 = arith.constant 0 : i32
    return %arg0, %c0_i32, %c0_i32_0, %c0_i32_1 : i32, i32, i32, i32
  }
  func.func @transform_1(%arg0: i32) -> (i32, i32, i32, i32) {
    %c0_i32 = arith.constant 0 : i32
    %c0_i32_0 = arith.constant 0 : i32
    %c0_i32_1 = arith.constant 0 : i32
    %c0_i32_2 = arith.constant 0 : i32
    return %arg0, %c0_i32, %c0_i32_0, %c0_i32_1 : i32, i32, i32, i32
  }
  func.func @transform_2(%arg0: i32) -> (i32, i32, i32, i32) {
    %c0_i32 = arith.constant 0 : i32
    %c0_i32_0 = arith.constant 0 : i32
    %c0_i32_1 = arith.constant 0 : i32
    %c0_i32_2 = arith.constant 0 : i32
    return %arg0, %c0_i32, %c0_i32_0, %c0_i32_1 : i32, i32, i32, i32
  }
  func.func @transform_3(%arg0: i32) -> (i32, i32, i32, i32) {
    %c0_i32 = arith.constant 0 : i32
    %c0_i32_0 = arith.constant 0 : i32
    %c0_i32_1 = arith.constant 0 : i32
    %c0_i32_2 = arith.constant 0 : i32
    return %arg0, %c0_i32, %c0_i32_0, %c0_i32_1 : i32, i32, i32, i32
  }
  func.func @transform_4(%arg0: i32) -> (i32, i32, i32, i32) {
    %c0_i32 = arith.constant 0 : i32
    %c0_i32_0 = arith.constant 0 : i32
    %c0_i32_1 = arith.constant 0 : i32
    %c0_i32_2 = arith.constant 0 : i32
    return %arg0, %c0_i32, %c0_i32_0, %c0_i32_1 : i32, i32, i32, i32
  }
  func.func @transform_5(%arg0: i32) -> (i32, i32, i32, i32) {
    %c0_i32 = arith.constant 0 : i32
    %c0_i32_0 = arith.constant 0 : i32
    %c0_i32_1 = arith.constant 0 : i32
    %c0_i32_2 = arith.constant 0 : i32
    return %arg0, %c0_i32, %c0_i32_0, %c0_i32_1 : i32, i32, i32, i32
  }
}

</mosaic_0001>

<llo_original>
// kernel: canny_forward.1
$region0: #{canny_forward.1}
  #allocation0 [shape = 'u32[]', space=smem, size = 0x4, offset = 0x4, fixed_abs, tag = 'smem constant byte address 0x4 - core index']
  #allocation1 [shape = 'u32[144,128]{1,0:T(1,128)}', space=vmem, size = 0x12000, scoped, tag = 'internal scratch']
  %s0 = inlined_call_operand.hbm [shape: f32[2,4,36,36], index: 0, kind: input, shape index: {}]
  %s1 = inlined_call_operand.hbm [shape: f32[2,4,36,128], index: 1, kind: output, shape index: {0}]
  %s2 = inlined_call_operand.hbm [shape: f32[2,1,16,128], index: 2, kind: output, shape index: {1}]
  %s3 = inlined_call_operand.hbm [shape: f32[2,1,16,128], index: 3, kind: output, shape index: {2}]
  %s4 = inlined_call_operand.hbm [shape: f32[2,1,16,128], index: 4, kind: output, shape index: {3}]
  %s5 = inlined_call_operand.hbm [shape: f32[2,1,16,128], index: 5, kind: output, shape index: {4}]
  %6 = xla_tuple %s1, %s2, %s3, %s4, %s5
  %s7 = sld [smem:[#allocation0]]
  $region73: #{canny_forward.1} parent=0
    _
  %s9 = ssub.s32 1, %s7
  %s10 = scalar_select 0, %s9, %s7
  $region1: #{canny_forward.1} parent=0
    #allocation2 [shape = 'u8[163840]{0}', space=vmem, size = 0x28000, scoped, tag = 'input window, operand 0']
    #allocation3 [shape = 's32[2]{0}', space=sflag, size = 0x8, scoped, tag = 'scoped memory for canny_forward.1']
    #allocation4 [shape = 's32[2]{0}', space=sflag, size = 0x8, scoped, tag = 'scoped memory for canny_forward.1']
    #allocation5 [shape = 'u8[163840]{0}', space=vmem, size = 0x28000, scoped, tag = 'output window, operand 0']
    #allocation6 [shape = 'u8[16384]{0}', space=vmem, size = 0x4000, scoped, tag = 'output window, operand 1']
    #allocation7 [shape = 's32[2]{0}', space=sflag, size = 0x8, scoped, tag = 'scoped memory for canny_forward.1']
    #allocation8 [shape = 'u8[16384]{0}', space=vmem, size = 0x4000, scoped, tag = 'output window, operand 2']
    #allocation9 [shape = 'u8[16384]{0}', space=vmem, size = 0x4000, scoped, tag = 'output window, operand 3']
    #allocation10 [shape = 's32[2]{0}', space=sflag, size = 0x8, scoped, tag = 'scoped memory for canny_forward.1']
    #allocation11 [shape = 'u8[16384]{0}', space=vmem, size = 0x4000, scoped, tag = 'output window, operand 4']
    %11 = vsyncpa [#allocation3], 0
    %s12 = scalar_lea.sflag [#allocation3], 1
    %13 = vsyncpa %s12, 0
    %14 = vsyncpa [#allocation4], 0
    %s15 = scalar_lea.sflag [#allocation4], 1
    %16 = vsyncpa %s15, 0
    %17 = vsyncpa [#allocation7], 0
    %s18 = scalar_lea.sflag [#allocation7], 1
    %19 = vsyncpa %s18, 0
    %20 = vsyncpa [#allocation10], 0
    %s21 = scalar_lea.sflag [#allocation10], 1
    %22 = vsyncpa %s21, 0
    loop: start=0, step=1, limit=4
    $region2: #{canny_forward.1} parent=1 // loop_pre_header
      _
    $region3: #{canny_forward.1} parent=1 // loop_header
      %s24 = sphi 0, %s28
      %p25 = scmp.ge.s32.totalorder %s24, 4
      %s34 = sphi 0, %s36
      %s37 = sphi 0, %s34
      %s38 = sphi 0, %s37
      %s54 = sphi 0, %s38
      %s60 = sphi 0, %s62
      %s63 = sphi 0, %s60
      %s64 = sphi 0, %s63
      %s80 = sphi 0, %s64
      %s86 = sphi 0, %s88
      %s89 = sphi 0, %s86
      %s90 = sphi 0, %s89
      %s106 = sphi 0, %s90
      %s112 = sphi 0, %s114
      %s115 = sphi 0, %s112
      %s116 = sphi 0, %s115
      %s132 = sphi 0, %s116
      %s138 = sphi 0, %s140
      %s141 = sphi 0, %s138
      %s142 = sphi 0, %s141
      %s158 = sphi 0, %s142
      %s164 = sphi 0, %s166
      %s167 = sphi 0, %s164
      %s168 = sphi 0, %s167
      %s184 = sphi 0, %s168
    $region4: #{canny_forward.1} parent=1 // loop_header_branch
      %27 = sbr.rel (%p25) target = $region8
    $region5: #{canny_forward.1} parent=1 // loop_body
      %s29 = ssub.s32 %s24, 1
      %s30 = ssub.s32 %s24, 2
      %s31 = sadd.s32 %s24, 1
      %s32 = ssub.s32 %s24, %s31
      %p33 = scmp.eq.s32.totalorder %s32, 0
      %s35 = sadd.s32 %s34, 1
      %s36 = scalar_select %p33, %s34, %s35
      %p39 = pneg %p33
      %p40 = scmp.eq.s32.totalorder %s24, 1
      %p41 = por %p39, %p40
      %p42 = scmp.ne.s32.totalorder %s34, %s37
      %p43 = scmp.eq.s32.totalorder %s24, 0
      %p44 = por %p42, %p43
      %p45 = scmp.ne.s32.totalorder %s34, %s37
      %p46 = scmp.eq.s32.totalorder %s29, 1
      %p47 = por %p45, %p46
      %p48 = scmp.ne.s32.totalorder %s37, %s38
      %p49 = scmp.eq.s32.totalorder %s29, 0
      %p50 = por %p48, %p49
      %p51 = scmp.ne.s32.totalorder %s37, %s38
      %p52 = scmp.eq.s32.totalorder %s30, 1
      %p53 = por %p51, %p52
      %p55 = scmp.ne.s32.totalorder %s38, %s54
      %p56 = scmp.eq.s32.totalorder %s30, 0
      %p57 = por %p55, %p56
      %s58 = ssub.s32 %s24, %s31
      %p59 = scmp.eq.s32.totalorder %s58, 0
      %s61 = sadd.s32 %s60, 1
      %s62 = scalar_select %p59, %s60, %s61
      %p65 = pneg %p59
      %p66 = scmp.eq.s32.totalorder %s24, 1
      %p67 = por %p65, %p66
      %p68 = scmp.ne.s32.totalorder %s60, %s63
      %p69 = scmp.eq.s32.totalorder %s24, 0
      %p70 = por %p68, %p69
      %p71 = scmp.ne.s32.totalorder %s60, %s63
      %p72 = scmp.eq.s32.totalorder %s29, 1
      %p73 = por %p71, %p72
      %p74 = scmp.ne.s32.totalorder %s63, %s64
      %p75 = scmp.eq.s32.totalorder %s29, 0
      %p76 = por %p74, %p75
      %p77 = scmp.ne.s32.totalorder %s63, %s64
      %p78 = scmp.eq.s32.totalorder %s30, 1
      %p79 = por %p77, %p78
      %p81 = scmp.ne.s32.totalorder %s64, %s80
      %p82 = scmp.eq.s32.totalorder %s30, 0
      %p83 = por %p81, %p82
      %s84 = ssub.s32 %s24, %s31
      %p85 = scmp.eq.s32.totalorder %s84, 0
      %s87 = sadd.s32 %s86, 1
      %s88 = scalar_select %p85, %s86, %s87
      %p91 = pneg %p85
      %p92 = scmp.eq.s32.totalorder %s24, 1
      %p93 = por %p91, %p92
      %p94 = scmp.ne.s32.totalorder %s86, %s89
      %p95 = scmp.eq.s32.totalorder %s24, 0
      %p96 = por %p94, %p95
      %p97 = scmp.ne.s32.totalorder %s86, %s89
      %p98 = scmp.eq.s32.totalorder %s29, 1
      %p99 = por %p97, %p98
      %p100 = scmp.ne.s32.totalorder %s89, %s90
      %p101 = scmp.eq.s32.totalorder %s29, 0
      %p102 = por %p100, %p101
      %p103 = scmp.ne.s32.totalorder %s89, %s90
      %p104 = scmp.eq.s32.totalorder %s30, 1
      %p105 = por %p103, %p104
      %p107 = scmp.ne.s32.totalorder %s90, %s106
      %p108 = scmp.eq.s32.totalorder %s30, 0
      %p109 = por %p107, %p108
      %s110 = ssub.s32 %s24, %s31
      %p111 = scmp.eq.s32.totalorder %s110, 0
      %s113 = sadd.s32 %s112, 1
      %s114 = scalar_select %p111, %s112, %s113
      %p117 = pneg %p111
      %p118 = scmp.eq.s32.totalorder %s24, 1
      %p119 = por %p117, %p118
      %p120 = scmp.ne.s32.totalorder %s112, %s115
      %p121 = scmp.eq.s32.totalorder %s24, 0
      %p122 = por %p120, %p121
      %p123 = scmp.ne.s32.totalorder %s112, %s115
      %p124 = scmp.eq.s32.totalorder %s29, 1
      %p125 = por %p123, %p124
      %p126 = scmp.ne.s32.totalorder %s115, %s116
      %p127 = scmp.eq.s32.totalorder %s29, 0
      %p128 = por %p126, %p127
      %p129 = scmp.ne.s32.totalorder %s115, %s116
      %p130 = scmp.eq.s32.totalorder %s30, 1
      %p131 = por %p129, %p130
      %p133 = scmp.ne.s32.totalorder %s116, %s132
      %p134 = scmp.eq.s32.totalorder %s30, 0
      %p135 = por %p133, %p134
      %s136 = ssub.s32 %s24, %s31
      %p137 = scmp.eq.s32.totalorder %s136, 0
      %s139 = sadd.s32 %s138, 1
      %s140 = scalar_select %p137, %s138, %s139
      %p143 = pneg %p137
      %p144 = scmp.eq.s32.totalorder %s24, 1
      %p145 = por %p143, %p144
      %p146 = scmp.ne.s32.totalorder %s138, %s141
      %p147 = scmp.eq.s32.totalorder %s24, 0
      %p148 = por %p146, %p147
      %p149 = scmp.ne.s32.totalorder %s138, %s141
      %p150 = scmp.eq.s32.totalorder %s29, 1
      %p151 = por %p149, %p150
      %p152 = scmp.ne.s32.totalorder %s141, %s142
      %p153 = scmp.eq.s32.totalorder %s29, 0
      %p154 = por %p152, %p153
      %p155 = scmp.ne.s32.totalorder %s141, %s142
      %p156 = scmp.eq.s32.totalorder %s30, 1
      %p157 = por %p155, %p156
      %p159 = scmp.ne.s32.totalorder %s142, %s158
      %p160 = scmp.eq.s32.totalorder %s30, 0
      %p161 = por %p159, %p160
      %s162 = ssub.s32 %s24, %s31
      %p163 = scmp.eq.s32.totalorder %s162, 0
      %s165 = sadd.s32 %s164, 1
      %s166 = scalar_select %p163, %s164, %s165
      %p169 = pneg %p163
      %p170 = scmp.eq.s32.totalorder %s24, 1
      %p171 = por %p169, %p170
      %p172 = scmp.ne.s32.totalorder %s164, %s167
      %p173 = scmp.eq.s32.totalorder %s24, 0
      %p174 = por %p172, %p173
      %p175 = scmp.ne.s32.totalorder %s164, %s167
      %p176 = scmp.eq.s32.totalorder %s29, 1
      %p177 = por %p175, %p176
      %p178 = scmp.ne.s32.totalorder %s167, %s168
      %p179 = scmp.eq.s32.totalorder %s29, 0
      %p180 = por %p178, %p179
      %p181 = scmp.ne.s32.totalorder %s167, %s168
      %p182 = scmp.eq.s32.totalorder %s30, 1
      %p183 = por %p181, %p182
      %p185 = scmp.ne.s32.totalorder %s168, %s184
      %p186 = scmp.eq.s32.totalorder %s30, 0
      %p187 = por %p185, %p186
      %p188 = scmp.le.s32.totalorder 1, %s24
      %p189 = scmp.lt.s32.totalorder %s24, 3
      %p190 = pnand %p188, %p189
      %p191 = pneg %p190
      // Predicated region
      $region9: #{canny_forward.1} parent=5 // pred_check
        _
      $region10: #{canny_forward.1} parent=5 // pred_check_branch
        %193 = sbr.rel (%p190) target = $region12
      $region11: #{canny_forward.1} parent=5 // pred_region
        %s194 = ssub.s32 %s24, 1
      $region12: #{canny_forward.1} parent=5 // pred_fallthru
        _
      %p195 = scmp.lt.s32.totalorder %s24, 2
      // Predicated region
      $region13: #{canny_forward.1} parent=5 // pred_check
        %p196 = pneg %p195
      $region14: #{canny_forward.1} parent=5 // pred_check_branch
        %198 = sbr.rel (%p196) target = $region16
      $region15: #{canny_forward.1} parent=5 // pred_region
        // Predicated region
        $region17: #{canny_forward.1} parent=15 // pred_check
          %p199 = pneg %p44
        $region18: #{canny_forward.1} parent=15 // pred_check_branch
          %201 = sbr.rel (%p199) target = $region20
        $region19: #{canny_forward.1} parent=15 // pred_region
          %s202 = sand.u32 %s34, 1
          %s203 = scalar_lea.sflag [#allocation3], %s202
          %s204 = sand.u32 %s34, 1
          %s205 = smul.addr %s204, 160
          %s206 = scalar_lea.vmem [#allocation2], %s205
          %s208 = ssub.s32 2560, 2560
          %209 = vsyncadd %s203, %s208
          %s210 = smul.addr %s24, 20
          %s211 = smul.addr %s210, 128
          %s212 = scalar_lea.hbm %s0, %s211
          %s213 = sshll.u32 %s206, 4
          %s214 = int_to_ptr.vmem [resolvable:$true] %s213
          %219 = dma.hbm_to_vmem [thread:$0]  %s212, 2560, %s214, %s203, 128, 128, 8
        $region20: #{canny_forward.1} parent=15 // pred_fallthru
          _
      $region16: #{canny_forward.1} parent=5 // pred_fallthru
        _
      %p220 = scmp.le.s32.totalorder 1, %s24
      %p221 = scmp.lt.s32.totalorder %s24, 3
      %p222 = pnand %p220, %p221
      %p223 = pneg %p222
      // Predicated region
      $region21: #{canny_forward.1} parent=5 // pred_check
        _
      $region22: #{canny_forward.1} parent=5 // pred_check_branch
        %225 = sbr.rel (%p222) target = $region24
      $region23: #{canny_forward.1} parent=5 // pred_region
        %s226 = ssub.s32 %s24, 1
        %s227 = sand.u32 %s37, 1
        %s228 = scalar_lea.sflag [#allocation3], %s227
        %s229 = sand.u32 %s37, 1
        %s230 = smul.addr %s229, 160
        %s231 = scalar_lea.vmem [#allocation2], %s230
        // Predicated region
        $region25: #{canny_forward.1} parent=23 // pred_check
          %p232 = pneg %p50
        $region26: #{canny_forward.1} parent=23 // pred_check_branch
          %234 = sbr.rel (%p232) target = $region28
        $region27: #{canny_forward.1} parent=23 // pred_region
          %235 = dma.done %s228, 2560
        $region28: #{canny_forward.1} parent=23 // pred_fallthru
          _
        %s236 = sand.u32 %s37, 1
        %s237 = scalar_lea.sflag [#allocation3], %s236
        %s238 = sand.u32 %s37, 1
        %s239 = smul.addr %s238, 160
        %s240 = scalar_lea.vmem [#allocation2], %s239
        %p241 = pneg %p50
        %p242 = pneg %p47
        %p243 = pneg %p76
        %p244 = pneg %p73
        %s245 = sand.u32 %s63, 1
        %s246 = scalar_lea.sflag [#allocation4], %s245
        %s247 = sand.u32 %s63, 1
        %s248 = smul.addr %s247, 160
        %s249 = scalar_lea.vmem [#allocation5], %s248
        %p250 = pneg %p102
        %p251 = pneg %p99
        %s252 = sand.u32 %s29, 1
        %s253 = scalar_lea.sflag [#allocation7], %s252
        %s254 = sand.u32 %s89, 1
        %s255 = smul.addr %s254, 16
        %s256 = scalar_lea.vmem [#allocation6], %s255
        %p257 = pneg %p128
        %p258 = pneg %p125
        %s259 = sand.u32 %s29, 1
        %s260 = scalar_lea.sflag [#allocation7], %s259
        %s261 = sand.u32 %s115, 1
        %s262 = smul.addr %s261, 16
        %s263 = scalar_lea.vmem [#allocation8], %s262
        %p264 = pneg %p154
        %p265 = pneg %p151
        %s266 = sand.u32 %s29, 1
        %s267 = scalar_lea.sflag [#allocation10], %s266
        %s268 = sand.u32 %s141, 1
        %s269 = smul.addr %s268, 16
        %s270 = scalar_lea.vmem [#allocation9], %s269
        %p271 = pneg %p180
        %p272 = pneg %p177
        %s273 = sand.u32 %s29, 1
        %s274 = scalar_lea.sflag [#allocation10], %s273
        %s275 = sand.u32 %s167, 1
        %s276 = smul.addr %s275, 16
        %s277 = scalar_lea.vmem [#allocation11], %s276
        %v278 = vld [vmem:[%s231] sm:$0xff]
        %v279 = vld [vmem:[%s231 + $0x8] sm:$0xff]
        %v280 = vld [vmem:[%s231 + $0x10] sm:$0xff]
        %v281 = vld [vmem:[%s231 + $0x18] sm:$0xff]
        %v282 = vld [vmem:[%s231 + $0x20] sm:$0xf]
        %vm288 = vcmask 1040384
        %v289 = vrot.slane %v278, 7
        %v290 = vrot.slane %v279, 7
        %v291 = vsel %vm288, %v289, %v290
        %v292 = vrot.slane %v280, 7
        %v293 = vsel %vm288, %v290, %v292
        %v294 = vrot.slane %v281, 7
        %v295 = vsel %vm288, %v292, %v294
        %v296 = vrot.slane %v282, 7
        %v297 = vsel %vm288, %v294, %v296
        %v300 = vsel %vm288, 0.0, %v289
        %vm301 = vcmask 1044480
        %v302 = vsel %vm301, %v297, 0.0
        %305 = vrot.lane.b32.xlu0 %v300, 1
        %v306 = vpop.permute.xlu0 %305
        %307 = vrot.lane.b32.xlu0 %v291, 1
        %v308 = vpop.permute.xlu0 %307
        %309 = vrot.lane.b32.xlu0 %v293, 1
        %v310 = vpop.permute.xlu0 %309
        %311 = vrot.lane.b32.xlu0 %v295, 1
        %v312 = vpop.permute.xlu0 %311
        %313 = vrot.lane.b32.xlu0 %v302, 1
        %v314 = vpop.permute.xlu0 %313
        %vm320 = vcmask 7168
        %v321 = vsel %vm320, 0.0, %v306
        %v322 = vsel %vm320, 0.0, %v308
        %v323 = vsel %vm320, 0.0, %v310
        %v324 = vsel %vm320, 0.0, %v312
        %v325 = vsel %vm320, 0.0, %v314
        %vm326 = vcmask 302080
        %v327 = vsel %vm326, %v321, 0.0
        %v328 = vsel %vm326, %v322, 0.0
        %v329 = vsel %vm326, %v323, 0.0
        %v330 = vsel %vm326, %v324, 0.0
        %v331 = vsel %vm326, %v325, 0.0
        %338 = vrot.lane.b32.xlu0 %v327, 126
        %v339 = vpop.permute.xlu0 %338
        %340 = vrot.lane.b32.xlu0 0.0, 126
        %v341 = vpop.permute.xlu0 %340
        %342 = vrot.lane.b32.xlu0 %v328, 126
        %v343 = vpop.permute.xlu0 %342
        %344 = vrot.lane.b32.xlu0 %v329, 126
        %v345 = vpop.permute.xlu0 %344
        %346 = vrot.lane.b32.xlu0 %v330, 126
        %v347 = vpop.permute.xlu0 %346
        %348 = vrot.lane.b32.xlu0 %v331, 126
        %v349 = vpop.permute.xlu0 %348
        %vm350 = vcmask 1031168
        %v351 = vsel %vm350, %v339, %v341
        %v352 = vsel %vm350, %v343, %v341
        %v353 = vsel %vm350, %v345, %v341
        %v354 = vsel %vm350, %v347, %v341
        %v355 = vsel %vm350, %v349, %v341
        %v362 = vadd.f32 %v327, %v351
        %v363 = vadd.f32 %v328, %v352
        %v364 = vadd.f32 %v341, 0.0
        %v365 = vadd.f32 %v329, %v353
        %v366 = vadd.f32 %v330, %v354
        %v367 = vadd.f32 %v331, %v355
        %v368 = vmul.f32 %v362, 0.27406862
        %v369 = vmul.f32 %v363, 0.27406862
        %v370 = vmul.f32 %v364, 0.27406862
        %v371 = vmul.f32 %v365, 0.27406862
        %v372 = vmul.f32 %v366, 0.27406862
        %v373 = vmul.f32 %v367, 0.27406862
        %v374 = vmul.f32 %v327, 0.45186275
        %v375 = vmul.f32 %v328, 0.45186275
        %v376 = vmul.f32 %v329, 0.45186275
        %v377 = vmul.f32 %v330, 0.45186275
        %v378 = vmul.f32 %v331, 0.45186275
        %384 = vrot.lane.b32.xlu0 %v374, 127
        %v385 = vpop.permute.xlu0 %384
        %386 = vrot.lane.b32.xlu0 0.0, 127
        %v387 = vpop.permute.xlu0 %386
        %388 = vrot.lane.b32.xlu0 %v375, 127
        %v389 = vpop.permute.xlu0 %388
        %390 = vrot.lane.b32.xlu0 %v376, 127
        %v391 = vpop.permute.xlu0 %390
        %392 = vrot.lane.b32.xlu0 %v377, 127
        %v393 = vpop.permute.xlu0 %392
        %394 = vrot.lane.b32.xlu0 %v378, 127
        %v395 = vpop.permute.xlu0 %394
        %vm396 = vcmask 1039360
        %v397 = vsel %vm396, %v385, %v387
        %v398 = vsel %vm396, %v389, %v387
        %v399 = vsel %vm396, %v391, %v387
        %v400 = vsel %vm396, %v393, %v387
        %v401 = vsel %vm396, %v395, %v387
        %v408 = vadd.f32 %v368, %v397
        %v409 = vadd.f32 %v369, %v398
        %v410 = vadd.f32 %v370, %v387
        %v411 = vadd.f32 %v371, %v399
        %v412 = vadd.f32 %v372, %v400
        %v413 = vadd.f32 %v373, %v401
        %vm420 = vcmask 1045504
        %v421 = vrot.slane %v408, 2
        %v422 = vrot.slane %v409, 2
        %v423 = vsel %vm420, %v421, %v422
        %v424 = vrot.slane %v411, 2
        %v425 = vsel %vm420, %v422, %v424
        %v426 = vrot.slane %v410, 2
        %v427 = vsel %vm420, %v426, %v426
        %v428 = vrot.slane %v412, 2
        %v429 = vsel %vm420, %v424, %v428
        %v430 = vrot.slane %v413, 2
        %v431 = vsel %vm420, %v428, %v430
        %v438 = vadd.f32 %v408, %v423
        %v439 = vadd.f32 %v409, %v425
        %v440 = vadd.f32 %v410, %v427
        %v441 = vadd.f32 %v411, %v429
        %v442 = vadd.f32 %v412, %v431
        %v443 = vadd.f32 %v413, %v430
        %v444 = vmul.f32 %v438, 0.27406862
        %v445 = vmul.f32 %v439, 0.27406862
        %v446 = vmul.f32 %v440, 0.27406862
        %v447 = vmul.f32 %v441, 0.27406862
        %v448 = vmul.f32 %v442, 0.27406862
        %v449 = vmul.f32 %v443, 0.27406862
        %v450 = vmul.f32 %v408, 0.45186275
        %v451 = vmul.f32 %v409, 0.45186275
        %v452 = vmul.f32 %v410, 0.45186275
        %v453 = vmul.f32 %v411, 0.45186275
        %v454 = vmul.f32 %v412, 0.45186275
        %v455 = vmul.f32 %v413, 0.45186275
        %vm462 = vcmask 1046528
        %v463 = vrot.slane %v450, 1
        %v464 = vrot.slane %v451, 1
        %v465 = vsel %vm462, %v463, %v464
        %v466 = vrot.slane %v453, 1
        %v467 = vsel %vm462, %v464, %v466
        %v468 = vrot.slane %v452, 1
        %v469 = vsel %vm462, %v468, %v468
        %v470 = vrot.slane %v454, 1
        %v471 = vsel %vm462, %v466, %v470
        %v472 = vrot.slane %v455, 1
        %v473 = vsel %vm462, %v470, %v472
        %v480 = vadd.f32 %v444, %v465
        %v481 = vadd.f32 %v445, %v467
        %v482 = vadd.f32 %v446, %v469
        %v483 = vadd.f32 %v447, %v471
        %v484 = vadd.f32 %v448, %v473
        %v485 = vadd.f32 %v449, %v472
        %486 = vst [vmem:[%s249] sm:$0xff] %v480
        %487 = vst [vmem:[%s249 + $0x8] sm:$0xff] %v481
        %488 = vst [vmem:[%s249 + $0x10] sm:$0xff] %v483
        %489 = vst [vmem:[%s249 + $0x18] sm:$0xff] %v484
        %490 = vst [vmem:[%s249 + $0x20] sm:$0xf] %v485
        %s491 = scalar_lea.vmem %s231, 40 [#allocation2]
        %v492 = vld [vmem:[%s491] sm:$0xff]
        %v493 = vld [vmem:[%s491 + $0x8] sm:$0xff]
        %v494 = vld [vmem:[%s491 + $0x10] sm:$0xff]
        %v495 = vld [vmem:[%s491 + $0x18] sm:$0xff]
        %v496 = vld [vmem:[%s491 + $0x20] sm:$0xf]
        %v502 = vrot.slane %v492, 7
        %v503 = vrot.slane %v493, 7
        %v504 = vsel %vm288, %v502, %v503
        %v505 = vrot.slane %v494, 7
        %v506 = vsel %vm288, %v503, %v505
        %v507 = vrot.slane %v495, 7
        %v508 = vsel %vm288, %v505, %v507
        %v509 = vrot.slane %v496, 7
        %v510 = vsel %vm288, %v507, %v509
        %v513 = vsel %vm288, 0.0, %v502
        %v514 = vsel %vm301, %v510, 0.0
        %517 = vrot.lane.b32.xlu0 %v513, 1
        %v518 = vpop.permute.xlu0 %517
        %519 = vrot.lane.b32.xlu0 %v504, 1
        %v520 = vpop.permute.xlu0 %519
        %521 = vrot.lane.b32.xlu0 %v506, 1
        %v522 = vpop.permute.xlu0 %521
        %523 = vrot.lane.b32.xlu0 %v508, 1
        %v524 = vpop.permute.xlu0 %523
        %525 = vrot.lane.b32.xlu0 %v514, 1
        %v526 = vpop.permute.xlu0 %525
        %v532 = vsel %vm320, 0.0, %v518
        %v533 = vsel %vm320, 0.0, %v520
        %v534 = vsel %vm320, 0.0, %v522
        %v535 = vsel %vm320, 0.0, %v524
        %v536 = vsel %vm320, 0.0, %v526
        %v537 = vsel %vm326, %v532, 0.0
        %v538 = vsel %vm326, %v533, 0.0
        %v539 = vsel %vm326, %v534, 0.0
        %v540 = vsel %vm326, %v535, 0.0
        %v541 = vsel %vm326, %v536, 0.0
        %547 = vrot.lane.b32.xlu0 %v537, 126
        %v548 = vpop.permute.xlu0 %547
        %549 = vrot.lane.b32.xlu0 %v538, 126
        %v550 = vpop.permute.xlu0 %549
        %551 = vrot.lane.b32.xlu0 %v539, 126
        %v552 = vpop.permute.xlu0 %551
        %553 = vrot.lane.b32.xlu0 %v540, 126
        %v554 = vpop.permute.xlu0 %553
        %555 = vrot.lane.b32.xlu0 %v541, 126
        %v556 = vpop.permute.xlu0 %555
        %v557 = vsel %vm350, %v548, %v341
        %v558 = vsel %vm350, %v550, %v341
        %v559 = vsel %vm350, %v552, %v341
        %v560 = vsel %vm350, %v554, %v341
        %v561 = vsel %vm350, %v556, %v341
        %v567 = vadd.f32 %v537, %v557
        %v568 = vadd.f32 %v538, %v558
        %v569 = vadd.f32 %v539, %v559
        %v570 = vadd.f32 %v540, %v560
        %v571 = vadd.f32 %v541, %v561
        %v572 = vmul.f32 %v567, 0.27406862
        %v573 = vmul.f32 %v568, 0.27406862
        %v574 = vmul.f32 %v569, 0.27406862
        %v575 = vmul.f32 %v570, 0.27406862
        %v576 = vmul.f32 %v571, 0.27406862
        %v577 = vmul.f32 %v537, 0.45186275
        %v578 = vmul.f32 %v538, 0.45186275
        %v579 = vmul.f32 %v539, 0.45186275
        %v580 = vmul.f32 %v540, 0.45186275
        %v581 = vmul.f32 %v541, 0.45186275
        %587 = vrot.lane.b32.xlu0 %v577, 127
        %v588 = vpop.permute.xlu0 %587
        %589 = vrot.lane.b32.xlu0 %v578, 127
        %v590 = vpop.permute.xlu0 %589
        %591 = vrot.lane.b32.xlu0 %v579, 127
        %v592 = vpop.permute.xlu0 %591
        %593 = vrot.lane.b32.xlu0 %v580, 127
        %v594 = vpop.permute.xlu0 %593
        %595 = vrot.lane.b32.xlu0 %v581, 127
        %v596 = vpop.permute.xlu0 %595
        %v597 = vsel %vm396, %v588, %v387
        %v598 = vsel %vm396, %v590, %v387
        %v599 = vsel %vm396, %v592, %v387
        %v600 = vsel %vm396, %v594, %v387
        %v601 = vsel %vm396, %v596, %v387
        %v607 = vadd.f32 %v572, %v597
        %v608 = vadd.f32 %v573, %v598
        %v609 = vadd.f32 %v574, %v599
        %v610 = vadd.f32 %v575, %v600
        %v611 = vadd.f32 %v576, %v601
        %v617 = vrot.slane %v607, 2
        %v618 = vrot.slane %v608, 2
        %v619 = vsel %vm420, %v617, %v618
        %v620 = vrot.slane %v609, 2
        %v621 = vsel %vm420, %v618, %v620
        %v622 = vrot.slane %v610, 2
        %v623 = vsel %vm420, %v620, %v622
        %v624 = vrot.slane %v611, 2
        %v625 = vsel %vm420, %v622, %v624
        %v631 = vadd.f32 %v607, %v619
        %v632 = vadd.f32 %v608, %v621
        %v633 = vadd.f32 %v609, %v623
        %v634 = vadd.f32 %v610, %v625
        %v635 = vadd.f32 %v611, %v624
        %v636 = vmul.f32 %v631, 0.27406862
        %v637 = vmul.f32 %v632, 0.27406862
        %v638 = vmul.f32 %v633, 0.27406862
        %v639 = vmul.f32 %v634, 0.27406862
        %v640 = vmul.f32 %v635, 0.27406862
        %v641 = vmul.f32 %v607, 0.45186275
        %v642 = vmul.f32 %v608, 0.45186275
        %v643 = vmul.f32 %v609, 0.45186275
        %v644 = vmul.f32 %v610, 0.45186275
        %v645 = vmul.f32 %v611, 0.45186275
        %v651 = vrot.slane %v641, 1
        %v652 = vrot.slane %v642, 1
        %v653 = vsel %vm462, %v651, %v652
        %v654 = vrot.slane %v643, 1
        %v655 = vsel %vm462, %v652, %v654
        %v656 = vrot.slane %v644, 1
        %v657 = vsel %vm462, %v654, %v656
        %v658 = vrot.slane %v645, 1
        %v659 = vsel %vm462, %v656, %v658
        %v665 = vadd.f32 %v636, %v653
        %v666 = vadd.f32 %v637, %v655
        %v667 = vadd.f32 %v638, %v657
        %v668 = vadd.f32 %v639, %v659
        %v669 = vadd.f32 %v640, %v658
        %s670 = scalar_lea.vmem %s249, 40 [#allocation5]
        %671 = vst [vmem:[%s670] sm:$0xff] %v665
        %672 = vst [vmem:[%s670 + $0x8] sm:$0xff] %v666
        %673 = vst [vmem:[%s670 + $0x10] sm:$0xff] %v667
        %674 = vst [vmem:[%s670 + $0x18] sm:$0xff] %v668
        %675 = vst [vmem:[%s670 + $0x20] sm:$0xf] %v669
        %v676 = vadd.f32 %v481, %v666
        %v677 = vadd.f32 %v482, %v482
        %v678 = vadd.f32 %v483, %v667
        %v679 = vadd.f32 %v484, %v668
        %s680 = scalar_lea.vmem %s231, 80 [#allocation2]
        %v681 = vld [vmem:[%s680] sm:$0xff]
        %v682 = vld [vmem:[%s680 + $0x8] sm:$0xff]
        %v683 = vld [vmem:[%s680 + $0x10] sm:$0xff]
        %v684 = vld [vmem:[%s680 + $0x18] sm:$0xff]
        %v685 = vld [vmem:[%s680 + $0x20] sm:$0xf]
        %v691 = vrot.slane %v681, 7
        %v692 = vrot.slane %v682, 7
        %v693 = vsel %vm288, %v691, %v692
        %v694 = vrot.slane %v683, 7
        %v695 = vsel %vm288, %v692, %v694
        %v696 = vrot.slane %v684, 7
        %v697 = vsel %vm288, %v694, %v696
        %v698 = vrot.slane %v685, 7
        %v699 = vsel %vm288, %v696, %v698
        %v702 = vsel %vm288, 0.0, %v691
        %v703 = vsel %vm301, %v699, 0.0
        %706 = vrot.lane.b32.xlu0 %v702, 1
        %v707 = vpop.permute.xlu0 %706
        %708 = vrot.lane.b32.xlu0 %v693, 1
        %v709 = vpop.permute.xlu0 %708
        %710 = vrot.lane.b32.xlu0 %v695, 1
        %v711 = vpop.permute.xlu0 %710
        %712 = vrot.lane.b32.xlu0 %v697, 1
        %v713 = vpop.permute.xlu0 %712
        %714 = vrot.lane.b32.xlu0 %v703, 1
        %v715 = vpop.permute.xlu0 %714
        %v721 = vsel %vm320, 0.0, %v707
        %v722 = vsel %vm320, 0.0, %v709
        %v723 = vsel %vm320, 0.0, %v711
        %v724 = vsel %vm320, 0.0, %v713
        %v725 = vsel %vm320, 0.0, %v715
        %v726 = vsel %vm326, %v721, 0.0
        %v727 = vsel %vm326, %v722, 0.0
        %v728 = vsel %vm326, %v723, 0.0
        %v729 = vsel %vm326, %v724, 0.0
        %v730 = vsel %vm326, %v725, 0.0
        %736 = vrot.lane.b32.xlu0 %v726, 126
        %v737 = vpop.permute.xlu0 %736
        %738 = vrot.lane.b32.xlu0 %v727, 126
        %v739 = vpop.permute.xlu0 %738
        %740 = vrot.lane.b32.xlu0 %v728, 126
        %v741 = vpop.permute.xlu0 %740
        %742 = vrot.lane.b32.xlu0 %v729, 126
        %v743 = vpop.permute.xlu0 %742
        %744 = vrot.lane.b32.xlu0 %v730, 126
        %v745 = vpop.permute.xlu0 %744
        %v746 = vsel %vm350, %v737, %v341
        %v747 = vsel %vm350, %v739, %v341
        %v748 = vsel %vm350, %v741, %v341
        %v749 = vsel %vm350, %v743, %v341
        %v750 = vsel %vm350, %v745, %v341
        %v756 = vadd.f32 %v726, %v746
        %v757 = vadd.f32 %v727, %v747
        %v758 = vadd.f32 %v728, %v748
        %v759 = vadd.f32 %v729, %v749
        %v760 = vadd.f32 %v730, %v750
        %v761 = vmul.f32 %v756, 0.27406862
        %v762 = vmul.f32 %v757, 0.27406862
        %v763 = vmul.f32 %v758, 0.27406862
        %v764 = vmul.f32 %v759, 0.27406862
        %v765 = vmul.f32 %v760, 0.27406862
        %v766 = vmul.f32 %v726, 0.45186275
        %v767 = vmul.f32 %v727, 0.45186275
        %v768 = vmul.f32 %v728, 0.45186275
        %v769 = vmul.f32 %v729, 0.45186275
        %v770 = vmul.f32 %v730, 0.45186275
        %776 = vrot.lane.b32.xlu0 %v766, 127
        %v777 = vpop.permute.xlu0 %776
        %778 = vrot.lane.b32.xlu0 %v767, 127
        %v779 = vpop.permute.xlu0 %778
        %780 = vrot.lane.b32.xlu0 %v768, 127
        %v781 = vpop.permute.xlu0 %780
        %782 = vrot.lane.b32.xlu0 %v769, 127
        %v783 = vpop.permute.xlu0 %782
        %784 = vrot.lane.b32.xlu0 %v770, 127
        %v785 = vpop.permute.xlu0 %784
        %v786 = vsel %vm396, %v777, %v387
        %v787 = vsel %vm396, %v779, %v387
        %v788 = vsel %vm396, %v781, %v387
        %v789 = vsel %vm396, %v783, %v387
        %v790 = vsel %vm396, %v785, %v387
        %v796 = vadd.f32 %v761, %v786
        %v797 = vadd.f32 %v762, %v787
        %v798 = vadd.f32 %v763, %v788
        %v799 = vadd.f32 %v764, %v789
        %v800 = vadd.f32 %v765, %v790
        %v806 = vrot.slane %v796, 2
        %v807 = vrot.slane %v797, 2
        %v808 = vsel %vm420, %v806, %v807
        %v809 = vrot.slane %v798, 2
        %v810 = vsel %vm420, %v807, %v809
        %v811 = vrot.slane %v799, 2
        %v812 = vsel %vm420, %v809, %v811
        %v813 = vrot.slane %v800, 2
        %v814 = vsel %vm420, %v811, %v813
        %v820 = vadd.f32 %v796, %v808
        %v821 = vadd.f32 %v797, %v810
        %v822 = vadd.f32 %v798, %v812
        %v823 = vadd.f32 %v799, %v814
        %v824 = vadd.f32 %v800, %v813
        %v825 = vmul.f32 %v820, 0.27406862
        %v826 = vmul.f32 %v821, 0.27406862
        %v827 = vmul.f32 %v822, 0.27406862
        %v828 = vmul.f32 %v823, 0.27406862
        %v829 = vmul.f32 %v824, 0.27406862
        %v830 = vmul.f32 %v796, 0.45186275
        %v831 = vmul.f32 %v797, 0.45186275
        %v832 = vmul.f32 %v798, 0.45186275
        %v833 = vmul.f32 %v799, 0.45186275
        %v834 = vmul.f32 %v800, 0.45186275
        %v840 = vrot.slane %v830, 1
        %v841 = vrot.slane %v831, 1
        %v842 = vsel %vm462, %v840, %v841
        %v843 = vrot.slane %v832, 1
        %v844 = vsel %vm462, %v841, %v843
        %v845 = vrot.slane %v833, 1
        %v846 = vsel %vm462, %v843, %v845
        %v847 = vrot.slane %v834, 1
        %v848 = vsel %vm462, %v845, %v847
        %v854 = vadd.f32 %v825, %v842
        %v855 = vadd.f32 %v826, %v844
        %v856 = vadd.f32 %v827, %v846
        %v857 = vadd.f32 %v828, %v848
        %v858 = vadd.f32 %v829, %v847
        %s859 = scalar_lea.vmem %s249, 80 [#allocation5]
        %860 = vst [vmem:[%s859] sm:$0xff] %v854
        %861 = vst [vmem:[%s859 + $0x8] sm:$0xff] %v855
        %862 = vst [vmem:[%s859 + $0x10] sm:$0xff] %v856
        %863 = vst [vmem:[%s859 + $0x18] sm:$0xff] %v857
        %864 = vst [vmem:[%s859 + $0x20] sm:$0xf] %v858
        %v865 = vadd.f32 %v676, %v855
        %v866 = vadd.f32 %v677, %v482
        %v867 = vadd.f32 %v678, %v856
        %v868 = vadd.f32 %v679, %v857
        %s869 = scalar_lea.vmem %s231, 120 [#allocation2]
        %v870 = vld [vmem:[%s869] sm:$0xff]
        %v871 = vld [vmem:[%s869 + $0x8] sm:$0xff]
        %v872 = vld [vmem:[%s869 + $0x10] sm:$0xff]
        %v873 = vld [vmem:[%s869 + $0x18] sm:$0xff]
        %v874 = vld [vmem:[%s869 + $0x20] sm:$0xf]
        %v880 = vrot.slane %v870, 7
        %v881 = vrot.slane %v871, 7
        %v882 = vsel %vm288, %v880, %v881
        %v883 = vrot.slane %v872, 7
        %v884 = vsel %vm288, %v881, %v883
        %v885 = vrot.slane %v873, 7
        %v886 = vsel %vm288, %v883, %v885
        %v887 = vrot.slane %v874, 7
        %v888 = vsel %vm288, %v885, %v887
        %v891 = vsel %vm288, 0.0, %v880
        %v892 = vsel %vm301, %v888, 0.0
        %895 = vrot.lane.b32.xlu0 %v891, 1
        %v896 = vpop.permute.xlu0 %895
        %897 = vrot.lane.b32.xlu0 %v882, 1
        %v898 = vpop.permute.xlu0 %897
        %899 = vrot.lane.b32.xlu0 %v884, 1
        %v900 = vpop.permute.xlu0 %899
        %901 = vrot.lane.b32.xlu0 %v886, 1
        %v902 = vpop.permute.xlu0 %901
        %903 = vrot.lane.b32.xlu0 %v892, 1
        %v904 = vpop.permute.xlu0 %903
        %v910 = vsel %vm320, 0.0, %v896
        %v911 = vsel %vm320, 0.0, %v898
        %v912 = vsel %vm320, 0.0, %v900
        %v913 = vsel %vm320, 0.0, %v902
        %v914 = vsel %vm320, 0.0, %v904
        %v915 = vsel %vm326, %v910, 0.0
        %v916 = vsel %vm326, %v911, 0.0
        %v917 = vsel %vm326, %v912, 0.0
        %v918 = vsel %vm326, %v913, 0.0
        %v919 = vsel %vm326, %v914, 0.0
        %925 = vrot.lane.b32.xlu0 %v915, 126
        %v926 = vpop.permute.xlu0 %925
        %927 = vrot.lane.b32.xlu0 %v916, 126
        %v928 = vpop.permute.xlu0 %927
        %929 = vrot.lane.b32.xlu0 %v917, 126
        %v930 = vpop.permute.xlu0 %929
        %931 = vrot.lane.b32.xlu0 %v918, 126
        %v932 = vpop.permute.xlu0 %931
        %933 = vrot.lane.b32.xlu0 %v919, 126
        %v934 = vpop.permute.xlu0 %933
        %v935 = vsel %vm350, %v926, %v341
        %v936 = vsel %vm350, %v928, %v341
        %v937 = vsel %vm350, %v930, %v341
        %v938 = vsel %vm350, %v932, %v341
        %v939 = vsel %vm350, %v934, %v341
        %v945 = vadd.f32 %v915, %v935
        %v946 = vadd.f32 %v916, %v936
        %v947 = vadd.f32 %v917, %v937
        %v948 = vadd.f32 %v918, %v938
        %v949 = vadd.f32 %v919, %v939
        %v950 = vmul.f32 %v945, 0.27406862
        %v951 = vmul.f32 %v946, 0.27406862
        %v952 = vmul.f32 %v947, 0.27406862
        %v953 = vmul.f32 %v948, 0.27406862
        %v954 = vmul.f32 %v949, 0.27406862
        %v955 = vmul.f32 %v915, 0.45186275
        %v956 = vmul.f32 %v916, 0.45186275
        %v957 = vmul.f32 %v917, 0.45186275
        %v958 = vmul.f32 %v918, 0.45186275
        %v959 = vmul.f32 %v919, 0.45186275
        %965 = vrot.lane.b32.xlu0 %v955, 127
        %v966 = vpop.permute.xlu0 %965
        %967 = vrot.lane.b32.xlu0 %v956, 127
        %v968 = vpop.permute.xlu0 %967
        %969 = vrot.lane.b32.xlu0 %v957, 127
        %v970 = vpop.permute.xlu0 %969
        %971 = vrot.lane.b32.xlu0 %v958, 127
        %v972 = vpop.permute.xlu0 %971
        %973 = vrot.lane.b32.xlu0 %v959, 127
        %v974 = vpop.permute.xlu0 %973
        %v975 = vsel %vm396, %v966, %v387
        %v976 = vsel %vm396, %v968, %v387
        %v977 = vsel %vm396, %v970, %v387
        %v978 = vsel %vm396, %v972, %v387
        %v979 = vsel %vm396, %v974, %v387
        %v985 = vadd.f32 %v950, %v975
        %v986 = vadd.f32 %v951, %v976
        %v987 = vadd.f32 %v952, %v977
        %v988 = vadd.f32 %v953, %v978
        %v989 = vadd.f32 %v954, %v979
        %v995 = vrot.slane %v985, 2
        %v996 = vrot.slane %v986, 2
        %v997 = vsel %vm420, %v995, %v996
        %v998 = vrot.slane %v987, 2
        %v999 = vsel %vm420, %v996, %v998
        %v1000 = vrot.slane %v988, 2
        %v1001 = vsel %vm420, %v998, %v1000
        %v1002 = vrot.slane %v989, 2
        %v1003 = vsel %vm420, %v1000, %v1002
        %v1009 = vadd.f32 %v985, %v997
        %v1010 = vadd.f32 %v986, %v999
        %v1011 = vadd.f32 %v987, %v1001
        %v1012 = vadd.f32 %v988, %v1003
        %v1013 = vadd.f32 %v989, %v1002
        %v1014 = vmul.f32 %v1009, 0.27406862
        %v1015 = vmul.f32 %v1010, 0.27406862
        %v1016 = vmul.f32 %v1011, 0.27406862
        %v1017 = vmul.f32 %v1012, 0.27406862
        %v1018 = vmul.f32 %v1013, 0.27406862
        %v1019 = vmul.f32 %v985, 0.45186275
        %v1020 = vmul.f32 %v986, 0.45186275
        %v1021 = vmul.f32 %v987, 0.45186275
        %v1022 = vmul.f32 %v988, 0.45186275
        %v1023 = vmul.f32 %v989, 0.45186275
        %v1029 = vrot.slane %v1019, 1
        %v1030 = vrot.slane %v1020, 1
        %v1031 = vsel %vm462, %v1029, %v1030
        %v1032 = vrot.slane %v1021, 1
        %v1033 = vsel %vm462, %v1030, %v1032
        %v1034 = vrot.slane %v1022, 1
        %v1035 = vsel %vm462, %v1032, %v1034
        %v1036 = vrot.slane %v1023, 1
        %v1037 = vsel %vm462, %v1034, %v1036
        %v1043 = vadd.f32 %v1014, %v1031
        %v1044 = vadd.f32 %v1015, %v1033
        %v1045 = vadd.f32 %v1016, %v1035
        %v1046 = vadd.f32 %v1017, %v1037
        %v1047 = vadd.f32 %v1018, %v1036
        %s1048 = scalar_lea.vmem %s249, 120 [#allocation5]
        %1049 = vst [vmem:[%s1048] sm:$0xff] %v1043
        %1050 = vst [vmem:[%s1048 + $0x8] sm:$0xff] %v1044
        %1051 = vst [vmem:[%s1048 + $0x10] sm:$0xff] %v1045
        %1052 = vst [vmem:[%s1048 + $0x18] sm:$0xff] %v1046
        %1053 = vst [vmem:[%s1048 + $0x20] sm:$0xf] %v1047
        %v1054 = vadd.f32 %v865, %v1044
        %v1055 = vadd.f32 %v866, %v482
        %v1056 = vadd.f32 %v867, %v1045
        %v1057 = vadd.f32 %v868, %v1046
        %1062 = vrot.lane.b32.xlu0 %v1054, 2
        %v1063 = vpop.permute.xlu0 %1062
        %1064 = vrot.lane.b32.xlu0 %v1055, 2
        %v1065 = vpop.permute.xlu0 %1064
        %1066 = vrot.lane.b32.xlu0 %v1056, 2
        %v1067 = vpop.permute.xlu0 %1066
        %1068 = vrot.lane.b32.xlu0 %v1057, 2
        %v1069 = vpop.permute.xlu0 %1068
        %vm1070 = vcmask 15360
        %v1071 = vsel %vm1070, %v1063, %v1065
        %v1072 = vsel %vm1070, %v1067, %v1065
        %v1073 = vsel %vm1070, %v1069, %v1065
        %v1080 = vsub.f32 %v1054, %v1063
        %v1081 = vsub.f32 %v1055, %v1071
        %v1082 = vsub.f32 %v1056, %v1067
        %v1083 = vsub.f32 %v1055, %v1072
        %v1084 = vsub.f32 %v1057, %v1069
        %v1085 = vsub.f32 %v1055, %v1073
        %v1092 = vrot.slane %v1080, 2
        %v1093 = vrot.slane %v1082, 2
        %v1094 = vsel %vm420, %v1092, %v1093
        %v1095 = vrot.slane %v1081, 2
        %v1096 = vrot.slane %v1083, 2
        %v1097 = vsel %vm420, %v1095, %v1096
        %v1098 = vrot.slane %v1084, 2
        %v1099 = vsel %vm420, %v1093, %v1098
        %v1100 = vrot.slane %v1085, 2
        %v1101 = vsel %vm420, %v1096, %v1100
        %v1108 = vadd.f32 %v1080, %v1094
        %v1109 = vadd.f32 %v1081, %v1097
        %v1110 = vadd.f32 %v1082, %v1099
        %v1111 = vadd.f32 %v1083, %v1101
        %v1112 = vadd.f32 %v1084, %v1098
        %v1113 = vadd.f32 %v1085, %v1100
        %v1114 = vmul.f32 %v1108, 0.125
        %v1115 = vmul.f32 %v1109, 0.125
        %v1116 = vmul.f32 %v1110, 0.125
        %v1117 = vmul.f32 %v1111, 0.125
        %v1118 = vmul.f32 %v1112, 0.125
        %v1119 = vmul.f32 %v1113, 0.125
        %v1120 = vmul.f32 %v1080, 0.25
        %v1121 = vmul.f32 %v1081, 0.25
        %v1122 = vmul.f32 %v1082, 0.25
        %v1123 = vmul.f32 %v1083, 0.25
        %v1124 = vmul.f32 %v1084, 0.25
        %v1125 = vmul.f32 %v1085, 0.25
        %v1132 = vrot.slane %v1120, 1
        %v1133 = vrot.slane %v1122, 1
        %v1134 = vsel %vm462, %v1132, %v1133
        %v1135 = vrot.slane %v1121, 1
        %v1136 = vrot.slane %v1123, 1
        %v1137 = vsel %vm462, %v1135, %v1136
        %v1138 = vrot.slane %v1124, 1
        %v1139 = vsel %vm462, %v1133, %v1138
        %v1140 = vrot.slane %v1125, 1
        %v1141 = vsel %vm462, %v1136, %v1140
        %v1148 = vadd.f32 %v1114, %v1134
        %v1149 = vadd.f32 %v1115, %v1137
        %v1150 = vadd.f32 %v1116, %v1139
        %v1151 = vadd.f32 %v1117, %v1141
        %v1152 = vadd.f32 %v1118, %v1138
        %v1153 = vadd.f32 %v1119, %v1140
        %1154 = vrot.lane.b32.xlu0 %v1054, 126
        %v1155 = vpop.permute.xlu0 %1154
        %1156 = vrot.lane.b32.xlu0 %v1055, 126
        %v1157 = vpop.permute.xlu0 %1156
        %1158 = vrot.lane.b32.xlu0 %v1056, 126
        %v1159 = vpop.permute.xlu0 %1158
        %1160 = vrot.lane.b32.xlu0 %v1057, 126
        %v1161 = vpop.permute.xlu0 %1160
        %v1162 = vsel %vm350, %v1155, %v1157
        %v1163 = vsel %vm350, %v1159, %v1157
        %v1164 = vsel %vm350, %v1161, %v1157
        %v1169 = vadd.f32 %v1054, %v1162
        %v1170 = vadd.f32 %v1055, %v1157
        %v1171 = vadd.f32 %v1056, %v1163
        %v1172 = vadd.f32 %v1057, %v1164
        %v1173 = vmul.f32 %v1169, 0.125
        %v1174 = vmul.f32 %v1170, 0.125
        %v1175 = vmul.f32 %v1171, 0.125
        %v1176 = vmul.f32 %v1172, 0.125
        %v1177 = vmul.f32 %v1054, 0.25
        %v1178 = vmul.f32 %v1055, 0.25
        %v1179 = vmul.f32 %v1056, 0.25
        %v1180 = vmul.f32 %v1057, 0.25
        %1185 = vrot.lane.b32.xlu0 %v1177, 127
        %v1186 = vpop.permute.xlu0 %1185
        %1187 = vrot.lane.b32.xlu0 %v1178, 127
        %v1188 = vpop.permute.xlu0 %1187
        %1189 = vrot.lane.b32.xlu0 %v1179, 127
        %v1190 = vpop.permute.xlu0 %1189
        %1191 = vrot.lane.b32.xlu0 %v1180, 127
        %v1192 = vpop.permute.xlu0 %1191
        %v1193 = vsel %vm396, %v1186, %v1188
        %v1194 = vsel %vm396, %v1190, %v1188
        %v1195 = vsel %vm396, %v1192, %v1188
        %v1200 = vadd.f32 %v1173, %v1193
        %v1201 = vadd.f32 %v1174, %v1188
        %v1202 = vadd.f32 %v1175, %v1194
        %v1203 = vadd.f32 %v1176, %v1195
        %vm1208 = vcmask 1041408
        %v1209 = vrot.slane %v1200, 6
        %v1210 = vrot.slane %v1201, 6
        %v1211 = vrot.slane %v1202, 6
        %v1212 = vsel %vm1208, %v1209, %v1211
        %v1213 = vsel %vm1208, %v1210, %v1210
        %v1214 = vrot.slane %v1203, 6
        %v1215 = vsel %vm1208, %v1211, %v1214
        %v1221 = vsub.f32 %v1200, %v1209
        %v1222 = vsub.f32 %v1201, %v1210
        %v1223 = vsub.f32 %v1202, %v1212
        %v1224 = vsub.f32 %v1201, %v1213
        %v1225 = vsub.f32 %v1203, %v1215
        %1232 = vrot.lane.b32.xlu0 %v1148, 117
        %v1233 = vpop.permute.xlu0 %1232
        %1234 = vrot.lane.b32.xlu0 %v1149, 117
        %v1235 = vpop.permute.xlu0 %1234
        %1236 = vrot.lane.b32.xlu0 %v1150, 117
        %v1237 = vpop.permute.xlu0 %1236
        %1238 = vrot.lane.b32.xlu0 %v1151, 117
        %v1239 = vpop.permute.xlu0 %1238
        %1240 = vrot.lane.b32.xlu0 %v1152, 117
        %v1241 = vpop.permute.xlu0 %1240
        %1242 = vrot.lane.b32.xlu0 %v1153, 117
        %v1243 = vpop.permute.xlu0 %1242
        %vm1244 = vcmask 957440
        %v1245 = vsel %vm1244, %v1233, %v1235
        %v1246 = vsel %vm1244, %v1237, %v1239
        %v1247 = vsel %vm1244, %v1241, %v1243
        %1251 = vst [vmem:[%s256 - $0x1] sm:$0xfe] %v1245
        %1252 = vst [vmem:[%s256 + $0x7] sm:$0xff] %v1246
        %1253 = vst [vmem:[%s256 + $0xf] sm:$0x1] %v1247
        %1259 = vrot.lane.b32.xlu0 %v1221, 119
        %v1260 = vpop.permute.xlu0 %1259
        %1261 = vrot.lane.b32.xlu0 %v1222, 119
        %v1262 = vpop.permute.xlu0 %1261
        %1263 = vrot.lane.b32.xlu0 %v1223, 119
        %v1264 = vpop.permute.xlu0 %1263
        %1265 = vrot.lane.b32.xlu0 %v1224, 119
        %v1266 = vpop.permute.xlu0 %1265
        %1267 = vrot.lane.b32.xlu0 %v1225, 119
        %v1268 = vpop.permute.xlu0 %1267
        %vm1269 = vcmask 973824
        %v1270 = vsel %vm1269, %v1260, %v1262
        %v1271 = vsel %vm1269, %v1264, %v1266
        %v1272 = vsel %vm1269, %v1268, %v1266
        %1276 = vst [vmem:[%s263 - $0x3] sm:$0xf8] %v1270
        %1277 = vst [vmem:[%s263 + $0x5] sm:$0xff] %v1271
        %1278 = vst [vmem:[%s263 + $0xd] sm:$0x7] %v1272
        %v1279 = vmul.f32 %v1148, %v1148
        %v1280 = vmul.f32 %v1149, %v1149
        %v1281 = vmul.f32 %v1150, %v1150
        %v1282 = vmul.f32 %v1151, %v1151
        %v1283 = vmul.f32 %v1152, %v1152
        %v1284 = vmul.f32 %v1153, %v1153
        %v1285 = vmul.f32 %v1221, %v1221
        %v1286 = vmul.f32 %v1222, %v1222
        %v1287 = vmul.f32 %v1223, %v1223
        %v1288 = vmul.f32 %v1224, %v1224
        %v1289 = vmul.f32 %v1225, %v1225
        %v1295 = vrot.slane %v1285, 2
        %v1296 = vrot.slane %v1287, 2
        %v1297 = vsel %vm420, %v1295, %v1296
        %v1298 = vrot.slane %v1286, 2
        %v1299 = vrot.slane %v1288, 2
        %v1300 = vsel %vm420, %v1298, %v1299
        %v1301 = vrot.slane %v1289, 2
        %v1302 = vsel %vm420, %v1296, %v1301
        %v1303 = vsel %vm420, %v1299, %v1299
        %1304 = vrot.lane.b32.xlu0 %v1297, 2
        %v1305 = vpop.permute.xlu0 %1304
        %1306 = vrot.lane.b32.xlu0 %v1300, 2
        %v1307 = vpop.permute.xlu0 %1306
        %1308 = vrot.lane.b32.xlu0 %v1302, 2
        %v1309 = vpop.permute.xlu0 %1308
        %1310 = vrot.lane.b32.xlu0 %v1303, 2
        %v1311 = vpop.permute.xlu0 %1310
        %1312 = vrot.lane.b32.xlu0 %v1301, 2
        %v1313 = vpop.permute.xlu0 %1312
        %1314 = vrot.lane.b32.xlu0 %v1299, 2
        %v1315 = vpop.permute.xlu0 %1314
        %v1316 = vsel %vm1070, %v1305, %v1307
        %v1317 = vsel %vm1070, %v1309, %v1311
        %v1318 = vsel %vm1070, %v1313, %v1315
        %v1325 = vadd.f32 %v1279, %v1305
        %v1326 = vadd.f32 %v1280, %v1316
        %v1327 = vadd.f32 %v1281, %v1309
        %v1328 = vadd.f32 %v1282, %v1317
        %v1329 = vadd.f32 %v1283, %v1313
        %v1330 = vadd.f32 %v1284, %v1318
        %v1331 = vrsqrt.pop %v1325
        %v1332 = vmul.f32 %v1325, %v1331
        %vm1333 = vcmp.eq.f32.partialorder %v1325, inf
        %v1334 = vsel %vm1333, %v1325, %v1332
        %vm1335 = vcmp.eq.f32.partialorder %v1325, 0.0
        %v1336 = vand.u32 %v1325, 2147483648
        %v1337 = vsel %vm1335, %v1336, %v1334
        %v1338 = vrsqrt.pop %v1326
        %v1339 = vmul.f32 %v1326, %v1338
        %vm1340 = vcmp.eq.f32.partialorder %v1326, inf
        %v1341 = vsel %vm1340, %v1326, %v1339
        %vm1342 = vcmp.eq.f32.partialorder %v1326, 0.0
        %v1343 = vand.u32 %v1326, 2147483648
        %v1344 = vsel %vm1342, %v1343, %v1341
        %v1345 = vrsqrt.pop %v1327
        %v1346 = vmul.f32 %v1327, %v1345
        %vm1347 = vcmp.eq.f32.partialorder %v1327, inf
        %v1348 = vsel %vm1347, %v1327, %v1346
        %vm1349 = vcmp.eq.f32.partialorder %v1327, 0.0
        %v1350 = vand.u32 %v1327, 2147483648
        %v1351 = vsel %vm1349, %v1350, %v1348
        %v1352 = vrsqrt.pop %v1328
        %v1353 = vmul.f32 %v1328, %v1352
        %vm1354 = vcmp.eq.f32.partialorder %v1328, inf
        %v1355 = vsel %vm1354, %v1328, %v1353
        %vm1356 = vcmp.eq.f32.partialorder %v1328, 0.0
        %v1357 = vand.u32 %v1328, 2147483648
        %v1358 = vsel %vm1356, %v1357, %v1355
        %v1359 = vrsqrt.pop %v1329
        %v1360 = vmul.f32 %v1329, %v1359
        %vm1361 = vcmp.eq.f32.partialorder %v1329, inf
        %v1362 = vsel %vm1361, %v1329, %v1360
        %vm1363 = vcmp.eq.f32.partialorder %v1329, 0.0
        %v1364 = vand.u32 %v1329, 2147483648
        %v1365 = vsel %vm1363, %v1364, %v1362
        %v1366 = vrsqrt.pop %v1330
        %v1367 = vmul.f32 %v1330, %v1366
        %vm1368 = vcmp.eq.f32.partialorder %v1330, inf
        %v1369 = vsel %vm1368, %v1330, %v1367
        %vm1370 = vcmp.eq.f32.partialorder %v1330, 0.0
        %v1371 = vand.u32 %v1330, 2147483648
        %v1372 = vsel %vm1370, %v1371, %v1369
        %v1373 = vlaneseq
        %v1374 = vshrl.u32 %v1373, 7
        %v1375 = vadd.s32 %v1374, 8
        %v1376 = vadd.s32 %v1374, 16
        %v1377 = vlaneseq
        %v1378 = vand.u32 %v1377, 127
        %v1379 = vadd.s32 %v1378, 128
        %vm1380 = vcmp.ge.s32.totalorder %v1374, 1
        %vm1381 = vcmp.ge.s32.totalorder %v1375, 1
        %vm1382 = vcmp.ge.s32.totalorder %v1376, 1
        %vm1383 = vcmp.le.s32.totalorder %v1374, 16
        %vm1384 = vcmp.le.s32.totalorder %v1375, 16
        %vm1385 = vcmp.le.s32.totalorder %v1376, 16
        %vm1386 = vmand %vm1380, %vm1383
        %vm1387 = vmand %vm1381, %vm1384
        %vm1388 = vmand %vm1382, %vm1385
        %vm1389 = vcmp.ge.s32.totalorder %v1378, 1
        %vm1390 = vcmp.ge.s32.totalorder %v1379, 1
        %vm1391 = vmand %vm1386, %vm1389
        %vm1392 = vmand %vm1386, %vm1390
        %vm1393 = vmand %vm1387, %vm1389
        %vm1394 = vmand %vm1387, %vm1390
        %vm1395 = vmand %vm1388, %vm1389
        %vm1396 = vmand %vm1388, %vm1390
        %vm1397 = vcmp.le.s32.totalorder %v1378, 16
        %vm1398 = vcmp.le.s32.totalorder %v1379, 16
        %vm1399 = vmand %vm1391, %vm1397
        %vm1400 = vmand %vm1392, %vm1398
        %vm1401 = vmand %vm1393, %vm1397
        %vm1402 = vmand %vm1394, %vm1398
        %vm1403 = vmand %vm1395, %vm1397
        %vm1404 = vmand %vm1396, %vm1398
        %1411 = vrot.lane.b32.xlu0 %v1337, 118
        %v1412 = vpop.permute.xlu0 %1411
        %1413 = vrot.lane.b32.xlu0 %v1344, 118
        %v1414 = vpop.permute.xlu0 %1413
        %1415 = vrot.lane.b32.xlu0 %v1351, 118
        %v1416 = vpop.permute.xlu0 %1415
        %1417 = vrot.lane.b32.xlu0 %v1358, 118
        %v1418 = vpop.permute.xlu0 %1417
        %1419 = vrot.lane.b32.xlu0 %v1365, 118
        %v1420 = vpop.permute.xlu0 %1419
        %1421 = vrot.lane.b32.xlu0 %v1372, 118
        %v1422 = vpop.permute.xlu0 %1421
        %vm1423 = vcmask 965632
        %v1424 = vsel %vm1423, %v1412, %v1414
        %v1425 = vsel %vm1423, %v1416, %v1418
        %v1426 = vsel %vm1423, %v1420, %v1422
        %v1433 = vsel %vm1399, %v1424, 0.0
        %v1434 = vsel %vm1400, %v1414, 0.0
        %v1435 = vsel %vm1401, %v1425, 0.0
        %v1436 = vsel %vm1402, %v1418, 0.0
        %v1437 = vsel %vm1403, %v1426, 0.0
        %v1438 = vsel %vm1404, %v1422, 0.0
        %1445 = vrot.lane.b32.xlu0 %v1433, 127
        %v1446 = vpop.permute.xlu0 %1445
        %1447 = vrot.lane.b32.xlu0 %v1434, 127
        %v1448 = vpop.permute.xlu0 %1447
        %1449 = vrot.lane.b32.xlu0 %v1435, 127
        %v1450 = vpop.permute.xlu0 %1449
        %1451 = vrot.lane.b32.xlu0 %v1436, 127
        %v1452 = vpop.permute.xlu0 %1451
        %1453 = vrot.lane.b32.xlu0 %v1437, 127
        %v1454 = vpop.permute.xlu0 %1453
        %1455 = vrot.lane.b32.xlu0 %v1438, 127
        %v1456 = vpop.permute.xlu0 %1455
        %v1457 = vsel %vm396, %v1446, %v1448
        %v1458 = vsel %vm396, %v1450, %v1452
        %v1459 = vsel %vm396, %v1454, %v1456
        %1463 = vst [vmem:[%s270 - $0x1] sm:$0xfe] %v1457
        %1464 = vst [vmem:[%s270 + $0x7] sm:$0xff] %v1458
        %1465 = vst [vmem:[%s270 + $0xf] sm:$0x1] %v1459
        %v1466 = vand.u32 2147483647, %v1148
        %v1467 = vand.u32 2147483647, %v1149
        %v1468 = vand.u32 2147483647, %v1150
        %v1469 = vand.u32 2147483647, %v1151
        %v1470 = vand.u32 2147483647, %v1152
        %v1471 = vand.u32 2147483647, %v1153
        %v1472 = vand.u32 2147483647, %v1221
        %v1473 = vand.u32 2147483647, %v1222
        %v1474 = vand.u32 2147483647, %v1223
        %v1475 = vand.u32 2147483647, %v1224
        %v1476 = vand.u32 2147483647, %v1225
        %v1477 = vmul.f32 %v1466, 0.19891237
        %v1478 = vmul.f32 %v1467, 0.19891237
        %v1479 = vmul.f32 %v1468, 0.19891237
        %v1480 = vmul.f32 %v1469, 0.19891237
        %v1481 = vmul.f32 %v1470, 0.19891237
        %v1482 = vmul.f32 %v1471, 0.19891237
        %v1489 = vrot.slane %v1477, 6
        %v1490 = vrot.slane %v1478, 6
        %v1491 = vrot.slane %v1479, 6
        %v1492 = vsel %vm1208, %v1489, %v1491
        %v1493 = vrot.slane %v1480, 6
        %v1494 = vsel %vm1208, %v1490, %v1493
        %v1495 = vrot.slane %v1481, 6
        %v1496 = vsel %vm1208, %v1491, %v1495
        %v1497 = vrot.slane %v1482, 6
        %v1498 = vsel %vm1208, %v1493, %v1497
        %1499 = vrot.lane.b32.xlu0 %v1489, 126
        %v1500 = vpop.permute.xlu0 %1499
        %1501 = vrot.lane.b32.xlu0 %v1490, 126
        %v1502 = vpop.permute.xlu0 %1501
        %1503 = vrot.lane.b32.xlu0 %v1492, 126
        %v1504 = vpop.permute.xlu0 %1503
        %1505 = vrot.lane.b32.xlu0 %v1494, 126
        %v1506 = vpop.permute.xlu0 %1505
        %1507 = vrot.lane.b32.xlu0 %v1496, 126
        %v1508 = vpop.permute.xlu0 %1507
        %1509 = vrot.lane.b32.xlu0 %v1498, 126
        %v1510 = vpop.permute.xlu0 %1509
        %v1511 = vsel %vm350, %v1500, %v1502
        %v1512 = vsel %vm350, %v1504, %v1506
        %v1513 = vsel %vm350, %v1508, %v1510
        %vm1520 = vcmp.lt.f32.partialorder %v1472, %v1511
        %vm1521 = vcmp.lt.f32.partialorder %v1473, %v1502
        %vm1522 = vcmp.lt.f32.partialorder %v1474, %v1512
        %vm1523 = vcmp.lt.f32.partialorder %v1475, %v1506
        %vm1524 = vcmp.lt.f32.partialorder %v1476, %v1513
        %vm1525 = vcmp.lt.f32.partialorder %v1475, %v1510
        %v1526 = vmul.f32 %v1466, 0.6681786
        %v1527 = vmul.f32 %v1467, 0.6681786
        %v1528 = vmul.f32 %v1468, 0.6681786
        %v1529 = vmul.f32 %v1469, 0.6681786
        %v1530 = vmul.f32 %v1470, 0.6681786
        %v1531 = vmul.f32 %v1471, 0.6681786
        %v1538 = vrot.slane %v1526, 6
        %v1539 = vrot.slane %v1527, 6
        %v1540 = vrot.slane %v1528, 6
        %v1541 = vsel %vm1208, %v1538, %v1540
        %v1542 = vrot.slane %v1529, 6
        %v1543 = vsel %vm1208, %v1539, %v1542
        %v1544 = vrot.slane %v1530, 6
        %v1545 = vsel %vm1208, %v1540, %v1544
        %v1546 = vrot.slane %v1531, 6
        %v1547 = vsel %vm1208, %v1542, %v1546
        %1548 = vrot.lane.b32.xlu0 %v1538, 126
        %v1549 = vpop.permute.xlu0 %1548
        %1550 = vrot.lane.b32.xlu0 %v1539, 126
        %v1551 = vpop.permute.xlu0 %1550
        %1552 = vrot.lane.b32.xlu0 %v1541, 126
        %v1553 = vpop.permute.xlu0 %1552
        %1554 = vrot.lane.b32.xlu0 %v1543, 126
        %v1555 = vpop.permute.xlu0 %1554
        %1556 = vrot.lane.b32.xlu0 %v1545, 126
        %v1557 = vpop.permute.xlu0 %1556
        %1558 = vrot.lane.b32.xlu0 %v1547, 126
        %v1559 = vpop.permute.xlu0 %1558
        %v1560 = vsel %vm350, %v1549, %v1551
        %v1561 = vsel %vm350, %v1553, %v1555
        %v1562 = vsel %vm350, %v1557, %v1559
        %vm1569 = vcmp.lt.f32.partialorder %v1472, %v1560
        %vm1570 = vcmp.lt.f32.partialorder %v1473, %v1551
        %vm1571 = vcmp.lt.f32.partialorder %v1474, %v1561
        %vm1572 = vcmp.lt.f32.partialorder %v1475, %v1555
        %vm1573 = vcmp.lt.f32.partialorder %v1476, %v1562
        %vm1574 = vcmp.lt.f32.partialorder %v1475, %v1559
        %v1575 = vmul.f32 %v1466, 1.4966058
        %v1576 = vmul.f32 %v1467, 1.4966058
        %v1577 = vmul.f32 %v1468, 1.4966058
        %v1578 = vmul.f32 %v1469, 1.4966058
        %v1579 = vmul.f32 %v1470, 1.4966058
        %v1580 = vmul.f32 %v1471, 1.4966058
        %v1587 = vrot.slane %v1575, 6
        %v1588 = vrot.slane %v1576, 6
        %v1589 = vrot.slane %v1577, 6
        %v1590 = vsel %vm1208, %v1587, %v1589
        %v1591 = vrot.slane %v1578, 6
        %v1592 = vsel %vm1208, %v1588, %v1591
        %v1593 = vrot.slane %v1579, 6
        %v1594 = vsel %vm1208, %v1589, %v1593
        %v1595 = vrot.slane %v1580, 6
        %v1596 = vsel %vm1208, %v1591, %v1595
        %1597 = vrot.lane.b32.xlu0 %v1587, 126
        %v1598 = vpop.permute.xlu0 %1597
        %1599 = vrot.lane.b32.xlu0 %v1588, 126
        %v1600 = vpop.permute.xlu0 %1599
        %1601 = vrot.lane.b32.xlu0 %v1590, 126
        %v1602 = vpop.permute.xlu0 %1601
        %1603 = vrot.lane.b32.xlu0 %v1592, 126
        %v1604 = vpop.permute.xlu0 %1603
        %1605 = vrot.lane.b32.xlu0 %v1594, 126
        %v1606 = vpop.permute.xlu0 %1605
        %1607 = vrot.lane.b32.xlu0 %v1596, 126
        %v1608 = vpop.permute.xlu0 %1607
        %v1609 = vsel %vm350, %v1598, %v1600
        %v1610 = vsel %vm350, %v1602, %v1604
        %v1611 = vsel %vm350, %v1606, %v1608
        %vm1618 = vcmp.lt.f32.partialorder %v1472, %v1609
        %vm1619 = vcmp.lt.f32.partialorder %v1473, %v1600
        %vm1620 = vcmp.lt.f32.partialorder %v1474, %v1610
        %vm1621 = vcmp.lt.f32.partialorder %v1475, %v1604
        %vm1622 = vcmp.lt.f32.partialorder %v1476, %v1611
        %vm1623 = vcmp.lt.f32.partialorder %v1475, %v1608
        %v1624 = vmul.f32 %v1466, 5.0273395
        %v1625 = vmul.f32 %v1467, 5.0273395
        %v1626 = vmul.f32 %v1468, 5.0273395
        %v1627 = vmul.f32 %v1469, 5.0273395
        %v1628 = vmul.f32 %v1470, 5.0273395
        %v1629 = vmul.f32 %v1471, 5.0273395
        %v1636 = vrot.slane %v1624, 6
        %v1637 = vrot.slane %v1625, 6
        %v1638 = vrot.slane %v1626, 6
        %v1639 = vsel %vm1208, %v1636, %v1638
        %v1640 = vrot.slane %v1627, 6
        %v1641 = vsel %vm1208, %v1637, %v1640
        %v1642 = vrot.slane %v1628, 6
        %v1643 = vsel %vm1208, %v1638, %v1642
        %v1644 = vrot.slane %v1629, 6
        %v1645 = vsel %vm1208, %v1640, %v1644
        %1646 = vrot.lane.b32.xlu0 %v1636, 126
        %v1647 = vpop.permute.xlu0 %1646
        %1648 = vrot.lane.b32.xlu0 %v1637, 126
        %v1649 = vpop.permute.xlu0 %1648
        %1650 = vrot.lane.b32.xlu0 %v1639, 126
        %v1651 = vpop.permute.xlu0 %1650
        %1652 = vrot.lane.b32.xlu0 %v1641, 126
        %v1653 = vpop.permute.xlu0 %1652
        %1654 = vrot.lane.b32.xlu0 %v1643, 126
        %v1655 = vpop.permute.xlu0 %1654
        %1656 = vrot.lane.b32.xlu0 %v1645, 126
        %v1657 = vpop.permute.xlu0 %1656
        %v1658 = vsel %vm350, %v1647, %v1649
        %v1659 = vsel %vm350, %v1651, %v1653
        %v1660 = vsel %vm350, %v1655, %v1657
        %vm1667 = vcmp.lt.f32.partialorder %v1472, %v1658
        %vm1668 = vcmp.lt.f32.partialorder %v1473, %v1649
        %vm1669 = vcmp.lt.f32.partialorder %v1474, %v1659
        %vm1670 = vcmp.lt.f32.partialorder %v1475, %v1653
        %vm1671 = vcmp.lt.f32.partialorder %v1476, %v1660
        %vm1672 = vcmp.lt.f32.partialorder %v1475, %v1657
        %v1673 = vrot.slane %v1221, 2
        %v1674 = vrot.slane %v1223, 2
        %v1675 = vsel %vm420, %v1673, %v1674
        %v1676 = vrot.slane %v1222, 2
        %v1677 = vrot.slane %v1224, 2
        %v1678 = vsel %vm420, %v1676, %v1677
        %v1679 = vrot.slane %v1225, 2
        %v1680 = vsel %vm420, %v1674, %v1679
        %v1681 = vsel %vm420, %v1677, %v1677
        %1682 = vrot.lane.b32.xlu0 %v1675, 2
        %v1683 = vpop.permute.xlu0 %1682
        %1684 = vrot.lane.b32.xlu0 %v1678, 2
        %v1685 = vpop.permute.xlu0 %1684
        %1686 = vrot.lane.b32.xlu0 %v1680, 2
        %v1687 = vpop.permute.xlu0 %1686
        %1688 = vrot.lane.b32.xlu0 %v1681, 2
        %v1689 = vpop.permute.xlu0 %1688
        %1690 = vrot.lane.b32.xlu0 %v1679, 2
        %v1691 = vpop.permute.xlu0 %1690
        %1692 = vrot.lane.b32.xlu0 %v1677, 2
        %v1693 = vpop.permute.xlu0 %1692
        %v1694 = vsel %vm1070, %v1683, %v1685
        %v1695 = vsel %vm1070, %v1687, %v1689
        %v1696 = vsel %vm1070, %v1691, %v1693
        %v1703 = vmul.f32 %v1148, %v1683
        %v1704 = vmul.f32 %v1149, %v1694
        %v1705 = vmul.f32 %v1150, %v1687
        %v1706 = vmul.f32 %v1151, %v1695
        %v1707 = vmul.f32 %v1152, %v1691
        %v1708 = vmul.f32 %v1153, %v1696
        %vm1709 = vcmp.ge.f32.partialorder %v1703, 0.0
        %vm1710 = vcmp.ge.f32.partialorder %v1704, 0.0
        %vm1711 = vcmp.ge.f32.partialorder %v1705, 0.0
        %vm1712 = vcmp.ge.f32.partialorder %v1706, 0.0
        %vm1713 = vcmp.ge.f32.partialorder %v1707, 0.0
        %vm1714 = vcmp.ge.f32.partialorder %v1708, 0.0
        %vm1715 = vmxor %vm1667, 1
        %vm1716 = vmxor %vm1668, 1
        %vm1717 = vmxor %vm1669, 1
        %vm1718 = vmxor %vm1670, 1
        %vm1719 = vmxor %vm1671, 1
        %vm1720 = vmxor %vm1672, 1
        %vm1721 = vmor %vm1520, %vm1715
        %vm1722 = vmor %vm1521, %vm1716
        %vm1723 = vmor %vm1522, %vm1717
        %vm1724 = vmor %vm1523, %vm1718
        %vm1725 = vmor %vm1524, %vm1719
        %vm1726 = vmor %vm1525, %vm1720
        %vm1727 = vmxor %vm1569, 1
        %vm1728 = vmxor %vm1570, 1
        %vm1729 = vmxor %vm1571, 1
        %vm1730 = vmxor %vm1572, 1
        %vm1731 = vmxor %vm1573, 1
        %vm1732 = vmxor %vm1574, 1
        %vm1733 = vmand %vm1727, %vm1618
        %vm1734 = vmand %vm1728, %vm1619
        %vm1735 = vmand %vm1729, %vm1620
        %vm1736 = vmand %vm1730, %vm1621
        %vm1737 = vmand %vm1731, %vm1622
        %vm1738 = vmand %vm1732, %vm1623
        %vm1739 = vmxor %vm1520, 1
        %vm1740 = vmxor %vm1521, 1
        %vm1741 = vmxor %vm1522, 1
        %vm1742 = vmxor %vm1523, 1
        %vm1743 = vmxor %vm1524, 1
        %vm1744 = vmxor %vm1525, 1
        %v1745 = vsel %vm1739, 1, 0
        %v1746 = vsel %vm1740, 1, 0
        %v1747 = vsel %vm1741, 1, 0
        %v1748 = vsel %vm1742, 1, 0
        %v1749 = vsel %vm1743, 1, 0
        %v1750 = vsel %vm1744, 1, 0
        %v1751 = vrot.slane %v1745, 2
        %v1752 = vrot.slane %v1747, 2
        %v1753 = vsel %vm420, %v1751, %v1752
        %v1754 = vrot.slane %v1746, 2
        %v1755 = vrot.slane %v1748, 2
        %v1756 = vsel %vm420, %v1754, %v1755
        %v1757 = vrot.slane %v1749, 2
        %v1758 = vsel %vm420, %v1752, %v1757
        %v1759 = vrot.slane %v1750, 2
        %v1760 = vsel %vm420, %v1755, %v1759
        %1761 = vrot.lane.b32.xlu0 %v1753, 2
        %v1762 = vpop.permute.xlu0 %1761
        %1763 = vrot.lane.b32.xlu0 %v1756, 2
        %v1764 = vpop.permute.xlu0 %1763
        %1765 = vrot.lane.b32.xlu0 %v1758, 2
        %v1766 = vpop.permute.xlu0 %1765
        %1767 = vrot.lane.b32.xlu0 %v1760, 2
        %v1768 = vpop.permute.xlu0 %1767
        %1769 = vrot.lane.b32.xlu0 %v1757, 2
        %v1770 = vpop.permute.xlu0 %1769
        %1771 = vrot.lane.b32.xlu0 %v1759, 2
        %v1772 = vpop.permute.xlu0 %1771
        %v1773 = vsel %vm1070, %v1762, %v1764
        %v1774 = vsel %vm1070, %v1766, %v1768
        %v1775 = vsel %vm1070, %v1770, %v1772
        %vm1776 = vcmp.ne.s32.totalorder %v1762, 0
        %vm1777 = vcmp.ne.s32.totalorder %v1773, 0
        %vm1778 = vcmp.ne.s32.totalorder %v1766, 0
        %vm1779 = vcmp.ne.s32.totalorder %v1774, 0
        %vm1780 = vcmp.ne.s32.totalorder %v1770, 0
        %vm1781 = vcmp.ne.s32.totalorder %v1775, 0
        %vm1782 = vmand %vm1709, %vm1776
        %vm1783 = vmand %vm1710, %vm1777
        %vm1784 = vmand %vm1711, %vm1778
        %vm1785 = vmand %vm1712, %vm1779
        %vm1786 = vmand %vm1713, %vm1780
        %vm1787 = vmand %vm1714, %vm1781
        %v1788 = vsel %vm1569, 1, 0
        %v1789 = vsel %vm1570, 1, 0
        %v1790 = vsel %vm1571, 1, 0
        %v1791 = vsel %vm1572, 1, 0
        %v1792 = vsel %vm1573, 1, 0
        %v1793 = vsel %vm1574, 1, 0
        %v1794 = vrot.slane %v1788, 2
        %v1795 = vrot.slane %v1790, 2
        %v1796 = vsel %vm420, %v1794, %v1795
        %v1797 = vrot.slane %v1789, 2
        %v1798 = vrot.slane %v1791, 2
        %v1799 = vsel %vm420, %v1797, %v1798
        %v1800 = vrot.slane %v1792, 2
        %v1801 = vsel %vm420, %v1795, %v1800
        %v1802 = vrot.slane %v1793, 2
        %v1803 = vsel %vm420, %v1798, %v1802
        %1804 = vrot.lane.b32.xlu0 %v1796, 2
        %v1805 = vpop.permute.xlu0 %1804
        %1806 = vrot.lane.b32.xlu0 %v1799, 2
        %v1807 = vpop.permute.xlu0 %1806
        %1808 = vrot.lane.b32.xlu0 %v1801, 2
        %v1809 = vpop.permute.xlu0 %1808
        %1810 = vrot.lane.b32.xlu0 %v1803, 2
        %v1811 = vpop.permute.xlu0 %1810
        %1812 = vrot.lane.b32.xlu0 %v1800, 2
        %v1813 = vpop.permute.xlu0 %1812
        %1814 = vrot.lane.b32.xlu0 %v1802, 2
        %v1815 = vpop.permute.xlu0 %1814
        %v1816 = vsel %vm1070, %v1805, %v1807
        %v1817 = vsel %vm1070, %v1809, %v1811
        %v1818 = vsel %vm1070, %v1813, %v1815
        %vm1819 = vcmp.ne.s32.totalorder %v1805, 0
        %vm1820 = vcmp.ne.s32.totalorder %v1816, 0
        %vm1821 = vcmp.ne.s32.totalorder %v1809, 0
        %vm1822 = vcmp.ne.s32.totalorder %v1817, 0
        %vm1823 = vcmp.ne.s32.totalorder %v1813, 0
        %vm1824 = vcmp.ne.s32.totalorder %v1818, 0
        %vm1825 = vmand %vm1782, %vm1819
        %vm1826 = vmand %vm1783, %vm1820
        %vm1827 = vmand %vm1784, %vm1821
        %vm1828 = vmand %vm1785, %vm1822
        %vm1829 = vmand %vm1786, %vm1823
        %vm1830 = vmand %vm1787, %vm1824
        %vm1831 = vmxor %vm1709, 1
        %vm1832 = vmxor %vm1710, 1
        %vm1833 = vmxor %vm1711, 1
        %vm1834 = vmxor %vm1712, 1
        %vm1835 = vmxor %vm1713, 1
        %vm1836 = vmxor %vm1714, 1
        %vm1837 = vmxor %vm1618, 1
        %vm1838 = vmxor %vm1619, 1
        %vm1839 = vmxor %vm1620, 1
        %vm1840 = vmxor %vm1621, 1
        %vm1841 = vmxor %vm1622, 1
        %vm1842 = vmxor %vm1623, 1
        %v1843 = vsel %vm1837, 1, 0
        %v1844 = vsel %vm1838, 1, 0
        %v1845 = vsel %vm1839, 1, 0
        %v1846 = vsel %vm1840, 1, 0
        %v1847 = vsel %vm1841, 1, 0
        %v1848 = vsel %vm1842, 1, 0
        %v1849 = vrot.slane %v1843, 2
        %v1850 = vrot.slane %v1845, 2
        %v1851 = vsel %vm420, %v1849, %v1850
        %v1852 = vrot.slane %v1844, 2
        %v1853 = vrot.slane %v1846, 2
        %v1854 = vsel %vm420, %v1852, %v1853
        %v1855 = vrot.slane %v1847, 2
        %v1856 = vsel %vm420, %v1850, %v1855
        %v1857 = vrot.slane %v1848, 2
        %v1858 = vsel %vm420, %v1853, %v1857
        %1859 = vrot.lane.b32.xlu0 %v1851, 2
        %v1860 = vpop.permute.xlu0 %1859
        %1861 = vrot.lane.b32.xlu0 %v1854, 2
        %v1862 = vpop.permute.xlu0 %1861
        %1863 = vrot.lane.b32.xlu0 %v1856, 2
        %v1864 = vpop.permute.xlu0 %1863
        %1865 = vrot.lane.b32.xlu0 %v1858, 2
        %v1866 = vpop.permute.xlu0 %1865
        %1867 = vrot.lane.b32.xlu0 %v1855, 2
        %v1868 = vpop.permute.xlu0 %1867
        %1869 = vrot.lane.b32.xlu0 %v1857, 2
        %v1870 = vpop.permute.xlu0 %1869
        %v1871 = vsel %vm1070, %v1860, %v1862
        %v1872 = vsel %vm1070, %v1864, %v1866
        %v1873 = vsel %vm1070, %v1868, %v1870
        %vm1874 = vcmp.ne.s32.totalorder %v1860, 0
        %vm1875 = vcmp.ne.s32.totalorder %v1871, 0
        %vm1876 = vcmp.ne.s32.totalorder %v1864, 0
        %vm1877 = vcmp.ne.s32.totalorder %v1872, 0
        %vm1878 = vcmp.ne.s32.totalorder %v1868, 0
        %vm1879 = vcmp.ne.s32.totalorder %v1873, 0
        %vm1880 = vmand %vm1831, %vm1874
        %vm1881 = vmand %vm1832, %vm1875
        %vm1882 = vmand %vm1833, %vm1876
        %vm1883 = vmand %vm1834, %vm1877
        %vm1884 = vmand %vm1835, %vm1878
        %vm1885 = vmand %vm1836, %vm1879
        %v1886 = vsel %vm1667, 1, 0
        %v1887 = vsel %vm1668, 1, 0
        %v1888 = vsel %vm1669, 1, 0
        %v1889 = vsel %vm1670, 1, 0
        %v1890 = vsel %vm1671, 1, 0
        %v1891 = vsel %vm1672, 1, 0
        %v1892 = vrot.slane %v1886, 2
        %v1893 = vrot.slane %v1888, 2
        %v1894 = vsel %vm420, %v1892, %v1893
        %v1895 = vrot.slane %v1887, 2
        %v1896 = vrot.slane %v1889, 2
        %v1897 = vsel %vm420, %v1895, %v1896
        %v1898 = vrot.slane %v1890, 2
        %v1899 = vsel %vm420, %v1893, %v1898
        %v1900 = vrot.slane %v1891, 2
        %v1901 = vsel %vm420, %v1896, %v1900
        %1902 = vrot.lane.b32.xlu0 %v1894, 2
        %v1903 = vpop.permute.xlu0 %1902
        %1904 = vrot.lane.b32.xlu0 %v1897, 2
        %v1905 = vpop.permute.xlu0 %1904
        %1906 = vrot.lane.b32.xlu0 %v1899, 2
        %v1907 = vpop.permute.xlu0 %1906
        %1908 = vrot.lane.b32.xlu0 %v1901, 2
        %v1909 = vpop.permute.xlu0 %1908
        %1910 = vrot.lane.b32.xlu0 %v1898, 2
        %v1911 = vpop.permute.xlu0 %1910
        %1912 = vrot.lane.b32.xlu0 %v1900, 2
        %v1913 = vpop.permute.xlu0 %1912
        %v1914 = vsel %vm1070, %v1903, %v1905
        %v1915 = vsel %vm1070, %v1907, %v1909
        %v1916 = vsel %vm1070, %v1911, %v1913
        %vm1917 = vcmp.ne.s32.totalorder %v1903, 0
        %vm1918 = vcmp.ne.s32.totalorder %v1914, 0
        %vm1919 = vcmp.ne.s32.totalorder %v1907, 0
        %vm1920 = vcmp.ne.s32.totalorder %v1915, 0
        %vm1921 = vcmp.ne.s32.totalorder %v1911, 0
        %vm1922 = vcmp.ne.s32.totalorder %v1916, 0
        %vm1923 = vmand %vm1880, %vm1917
        %vm1924 = vmand %vm1881, %vm1918
        %vm1925 = vmand %vm1882, %vm1919
        %vm1926 = vmand %vm1883, %vm1920
        %vm1927 = vmand %vm1884, %vm1921
        %vm1928 = vmand %vm1885, %vm1922
        %vm1929 = vmor %vm1825, %vm1923
        %vm1930 = vmor %vm1826, %vm1924
        %vm1931 = vmor %vm1827, %vm1925
        %vm1932 = vmor %vm1828, %vm1926
        %vm1933 = vmor %vm1829, %vm1927
        %vm1934 = vmor %vm1830, %vm1928
        %vm1935 = vmand %vm1831, %vm1776
        %vm1936 = vmand %vm1832, %vm1777
        %vm1937 = vmand %vm1833, %vm1778
        %vm1938 = vmand %vm1834, %vm1779
        %vm1939 = vmand %vm1835, %vm1780
        %vm1940 = vmand %vm1836, %vm1781
        %vm1941 = vmand %vm1935, %vm1819
        %vm1942 = vmand %vm1936, %vm1820
        %vm1943 = vmand %vm1937, %vm1821
        %vm1944 = vmand %vm1938, %vm1822
        %vm1945 = vmand %vm1939, %vm1823
        %vm1946 = vmand %vm1940, %vm1824
        %vm1947 = vmand %vm1709, %vm1874
        %vm1948 = vmand %vm1710, %vm1875
        %vm1949 = vmand %vm1711, %vm1876
        %vm1950 = vmand %vm1712, %vm1877
        %vm1951 = vmand %vm1713, %vm1878
        %vm1952 = vmand %vm1714, %vm1879
        %vm1953 = vmand %vm1947, %vm1917
        %vm1954 = vmand %vm1948, %vm1918
        %vm1955 = vmand %vm1949, %vm1919
        %vm1956 = vmand %vm1950, %vm1920
        %vm1957 = vmand %vm1951, %vm1921
        %vm1958 = vmand %vm1952, %vm1922
        %vm1959 = vmor %vm1941, %vm1953
        %vm1960 = vmor %vm1942, %vm1954
        %vm1961 = vmor %vm1943, %vm1955
        %vm1962 = vmor %vm1944, %vm1956
        %vm1963 = vmor %vm1945, %vm1957
        %vm1964 = vmor %vm1946, %vm1958
        %vm1965 = vcmp.gt.f32.partialorder %v1466, 0.0
        %vm1966 = vcmp.gt.f32.partialorder %v1467, 0.0
        %vm1967 = vcmp.gt.f32.partialorder %v1468, 0.0
        %vm1968 = vcmp.gt.f32.partialorder %v1469, 0.0
        %vm1969 = vcmp.gt.f32.partialorder %v1470, 0.0
        %vm1970 = vcmp.gt.f32.partialorder %v1471, 0.0
        %vm1971 = vcmp.gt.f32.partialorder %v1472, 0.0
        %vm1972 = vcmp.gt.f32.partialorder %v1473, 0.0
        %vm1973 = vcmp.gt.f32.partialorder %v1474, 0.0
        %vm1974 = vcmp.gt.f32.partialorder %v1475, 0.0
        %vm1975 = vcmp.gt.f32.partialorder %v1476, 0.0
        %v1976 = vsel %vm1971, 1, 0
        %v1977 = vsel %vm1972, 1, 0
        %v1978 = vsel %vm1973, 1, 0
        %v1979 = vsel %vm1974, 1, 0
        %v1980 = vsel %vm1975, 1, 0
        %v1981 = vrot.slane %v1976, 2
        %v1982 = vrot.slane %v1978, 2
        %v1983 = vsel %vm420, %v1981, %v1982
        %v1984 = vrot.slane %v1977, 2
        %v1985 = vrot.slane %v1979, 2
        %v1986 = vsel %vm420, %v1984, %v1985
        %v1987 = vrot.slane %v1980, 2
        %v1988 = vsel %vm420, %v1982, %v1987
        %v1989 = vsel %vm420, %v1985, %v1985
        %1990 = vrot.lane.b32.xlu0 %v1983, 2
        %v1991 = vpop.permute.xlu0 %1990
        %1992 = vrot.lane.b32.xlu0 %v1986, 2
        %v1993 = vpop.permute.xlu0 %1992
        %1994 = vrot.lane.b32.xlu0 %v1988, 2
        %v1995 = vpop.permute.xlu0 %1994
        %1996 = vrot.lane.b32.xlu0 %v1989, 2
        %v1997 = vpop.permute.xlu0 %1996
        %1998 = vrot.lane.b32.xlu0 %v1987, 2
        %v1999 = vpop.permute.xlu0 %1998
        %2000 = vrot.lane.b32.xlu0 %v1985, 2
        %v2001 = vpop.permute.xlu0 %2000
        %v2002 = vsel %vm1070, %v1991, %v1993
        %v2003 = vsel %vm1070, %v1995, %v1997
        %v2004 = vsel %vm1070, %v1999, %v2001
        %vm2005 = vcmp.ne.s32.totalorder %v1991, 0
        %vm2006 = vcmp.ne.s32.totalorder %v2002, 0
        %vm2007 = vcmp.ne.s32.totalorder %v1995, 0
        %vm2008 = vcmp.ne.s32.totalorder %v2003, 0
        %vm2009 = vcmp.ne.s32.totalorder %v1999, 0
        %vm2010 = vcmp.ne.s32.totalorder %v2004, 0
        %vm2011 = vmor %vm1965, %vm2005
        %vm2012 = vmor %vm1966, %vm2006
        %vm2013 = vmor %vm1967, %vm2007
        %vm2014 = vmor %vm1968, %vm2008
        %vm2015 = vmor %vm1969, %vm2009
        %vm2016 = vmor %vm1970, %vm2010
        %vm2020 = vcmp.gt.f32.partialorder %v1433, %v1457
        %vm2021 = vcmp.gt.f32.partialorder %v1434, %v1448
        %vm2022 = vcmp.gt.f32.partialorder %v1435, %v1458
        %vm2023 = vcmp.gt.f32.partialorder %v1436, %v1452
        %vm2024 = vcmp.gt.f32.partialorder %v1437, %v1459
        %vm2025 = vcmp.gt.f32.partialorder %v1438, %v1456
        %2026 = vrot.lane.b32.xlu0 %v1433, 1
        %v2027 = vpop.permute.xlu0 %2026
        %2028 = vrot.lane.b32.xlu0 %v1435, 1
        %v2029 = vpop.permute.xlu0 %2028
        %2030 = vrot.lane.b32.xlu0 %v1437, 1
        %v2031 = vpop.permute.xlu0 %2030
        %vm2035 = vcmp.gt.f32.partialorder %v1433, %v2027
        %vm2036 = vcmp.gt.f32.partialorder %v1434, %v2027
        %vm2037 = vcmp.gt.f32.partialorder %v1435, %v2029
        %vm2038 = vcmp.gt.f32.partialorder %v1436, %v2029
        %vm2039 = vcmp.gt.f32.partialorder %v1437, %v2031
        %vm2040 = vcmp.gt.f32.partialorder %v1438, %v2031
        %vm2041 = vmand %vm2020, %vm2035
        %vm2042 = vmand %vm2021, %vm2036
        %vm2043 = vmand %vm2022, %vm2037
        %vm2044 = vmand %vm2023, %vm2038
        %vm2045 = vmand %vm2024, %vm2039
        %vm2046 = vmand %vm2025, %vm2040
        %v2047 = vsel %vm1721, 1, 0
        %v2048 = vsel %vm1722, 1, 0
        %v2049 = vsel %vm1723, 1, 0
        %v2050 = vsel %vm1724, 1, 0
        %v2051 = vsel %vm1725, 1, 0
        %v2052 = vsel %vm1726, 1, 0
        %v2053 = vrot.slane %v2047, 2
        %v2054 = vrot.slane %v2049, 2
        %v2055 = vsel %vm420, %v2053, %v2054
        %v2056 = vrot.slane %v2048, 2
        %v2057 = vrot.slane %v2050, 2
        %v2058 = vsel %vm420, %v2056, %v2057
        %v2059 = vrot.slane %v2051, 2
        %v2060 = vsel %vm420, %v2054, %v2059
        %v2061 = vrot.slane %v2052, 2
        %v2062 = vsel %vm420, %v2057, %v2061
        %2063 = vrot.lane.b32.xlu0 %v2055, 2
        %v2064 = vpop.permute.xlu0 %2063
        %2065 = vrot.lane.b32.xlu0 %v2058, 2
        %v2066 = vpop.permute.xlu0 %2065
        %2067 = vrot.lane.b32.xlu0 %v2060, 2
        %v2068 = vpop.permute.xlu0 %2067
        %2069 = vrot.lane.b32.xlu0 %v2062, 2
        %v2070 = vpop.permute.xlu0 %2069
        %2071 = vrot.lane.b32.xlu0 %v2059, 2
        %v2072 = vpop.permute.xlu0 %2071
        %2073 = vrot.lane.b32.xlu0 %v2061, 2
        %v2074 = vpop.permute.xlu0 %2073
        %v2075 = vsel %vm1070, %v2064, %v2066
        %v2076 = vsel %vm1070, %v2068, %v2070
        %v2077 = vsel %vm1070, %v2072, %v2074
        %vm2078 = vcmp.ne.s32.totalorder %v2064, 0
        %vm2079 = vcmp.ne.s32.totalorder %v2075, 0
        %vm2080 = vcmp.ne.s32.totalorder %v2068, 0
        %vm2081 = vcmp.ne.s32.totalorder %v2076, 0
        %vm2082 = vcmp.ne.s32.totalorder %v2072, 0
        %vm2083 = vcmp.ne.s32.totalorder %v2077, 0
        %vm2084 = vmand %vm2011, %vm2078
        %vm2085 = vmand %vm2012, %vm2079
        %vm2086 = vmand %vm2013, %vm2080
        %vm2087 = vmand %vm2014, %vm2081
        %vm2088 = vmand %vm2015, %vm2082
        %vm2089 = vmand %vm2016, %vm2083
        %vm2090 = vmxor %vm2041, 1
        %vm2091 = vmxor %vm2042, 1
        %vm2092 = vmxor %vm2043, 1
        %vm2093 = vmxor %vm2044, 1
        %vm2094 = vmxor %vm2045, 1
        %vm2095 = vmxor %vm2046, 1
        %v2096 = vsel %vm2090, 1, 0
        %v2097 = vsel %vm2091, 1, 0
        %v2098 = vsel %vm2092, 1, 0
        %v2099 = vsel %vm2093, 1, 0
        %v2100 = vsel %vm2094, 1, 0
        %v2101 = vsel %vm2095, 1, 0
        %2102 = vrot.lane.b32.xlu0 %v2096, 10
        %v2103 = vpop.permute.xlu0 %2102
        %2104 = vrot.lane.b32.xlu0 %v2097, 10
        %v2105 = vpop.permute.xlu0 %2104
        %2106 = vrot.lane.b32.xlu0 %v2098, 10
        %v2107 = vpop.permute.xlu0 %2106
        %2108 = vrot.lane.b32.xlu0 %v2099, 10
        %v2109 = vpop.permute.xlu0 %2108
        %2110 = vrot.lane.b32.xlu0 %v2100, 10
        %v2111 = vpop.permute.xlu0 %2110
        %2112 = vrot.lane.b32.xlu0 %v2101, 10
        %v2113 = vpop.permute.xlu0 %2112
        %vm2114 = vcmask 80896
        %v2115 = vsel %vm2114, %v2103, %v2105
        %v2116 = vsel %vm2114, %v2107, %v2109
        %v2117 = vsel %vm2114, %v2111, %v2113
        %vm2118 = vcmp.ne.s32.totalorder %v2103, 0
        %vm2119 = vcmp.ne.s32.totalorder %v2115, 0
        %vm2120 = vcmp.ne.s32.totalorder %v2107, 0
        %vm2121 = vcmp.ne.s32.totalorder %v2116, 0
        %vm2122 = vcmp.ne.s32.totalorder %v2111, 0
        %vm2123 = vcmp.ne.s32.totalorder %v2117, 0
        %vm2124 = vmand %vm2084, %vm2118
        %vm2125 = vmand %vm2085, %vm2119
        %vm2126 = vmand %vm2086, %vm2120
        %vm2127 = vmand %vm2087, %vm2121
        %vm2128 = vmand %vm2088, %vm2122
        %vm2129 = vmand %vm2089, %vm2123
        %2130 = vrot.lane.b32.xlu0 %v1433, 10
        %v2131 = vpop.permute.xlu0 %2130
        %2132 = vrot.lane.b32.xlu0 %v1434, 10
        %v2133 = vpop.permute.xlu0 %2132
        %2134 = vrot.lane.b32.xlu0 %v1435, 10
        %v2135 = vpop.permute.xlu0 %2134
        %2136 = vrot.lane.b32.xlu0 %v1436, 10
        %v2137 = vpop.permute.xlu0 %2136
        %2138 = vrot.lane.b32.xlu0 %v1437, 10
        %v2139 = vpop.permute.xlu0 %2138
        %2140 = vrot.lane.b32.xlu0 %v1438, 10
        %v2141 = vpop.permute.xlu0 %2140
        %v2142 = vsel %vm2114, %v2131, %v2133
        %v2143 = vsel %vm2114, %v2135, %v2137
        %v2144 = vsel %vm2114, %v2139, %v2141
        %v2151 = vsel %vm2124, 0.0, %v2131
        %v2152 = vsel %vm2125, 0.0, %v2142
        %v2153 = vsel %vm2126, 0.0, %v2135
        %v2154 = vsel %vm2127, 0.0, %v2143
        %v2155 = vsel %vm2128, 0.0, %v2139
        %v2156 = vsel %vm2129, 0.0, %v2144
        %v2157 = vrot.slane %v1433, 7
        %v2158 = vrot.slane %v1434, 7
        %v2159 = vrot.slane %v1435, 7
        %v2160 = vsel %vm288, %v2157, %v2159
        %v2161 = vrot.slane %v1436, 7
        %v2162 = vsel %vm288, %v2158, %v2161
        %2163 = vrot.lane.b32.xlu0 %v2157, 127
        %v2164 = vpop.permute.xlu0 %2163
        %2165 = vrot.lane.b32.xlu0 %v2158, 127
        %v2166 = vpop.permute.xlu0 %2165
        %2167 = vrot.lane.b32.xlu0 %v2160, 127
        %v2168 = vpop.permute.xlu0 %2167
        %2169 = vrot.lane.b32.xlu0 %v2162, 127
        %v2170 = vpop.permute.xlu0 %2169
        %2171 = vrot.lane.b32.xlu0 %v2159, 127
        %v2172 = vpop.permute.xlu0 %2171
        %2173 = vrot.lane.b32.xlu0 %v2161, 127
        %v2174 = vpop.permute.xlu0 %2173
        %v2175 = vsel %vm396, %v2164, %v2166
        %v2176 = vsel %vm396, %v2168, %v2170
        %v2177 = vsel %vm396, %v2172, %v2174
        %vm2184 = vcmp.gt.f32.partialorder %v1433, %v2175
        %vm2185 = vcmp.gt.f32.partialorder %v1434, %v2166
        %vm2186 = vcmp.gt.f32.partialorder %v1435, %v2176
        %vm2187 = vcmp.gt.f32.partialorder %v1436, %v2170
        %vm2188 = vcmp.gt.f32.partialorder %v1437, %v2177
        %vm2189 = vcmp.gt.f32.partialorder %v1438, %v2174
        %v2190 = vrot.slane %v1433, 1
        %v2191 = vrot.slane %v1435, 1
        %v2192 = vsel %vm462, %v2190, %v2191
        %v2193 = vrot.slane %v1437, 1
        %v2194 = vsel %vm462, %v2191, %v2193
        %2195 = vrot.lane.b32.xlu0 %v2192, 1
        %v2196 = vpop.permute.xlu0 %2195
        %2197 = vrot.lane.b32.xlu0 %v2194, 1
        %v2198 = vpop.permute.xlu0 %2197
        %2199 = vrot.lane.b32.xlu0 %v2193, 1
        %v2200 = vpop.permute.xlu0 %2199
        %vm2204 = vcmp.gt.f32.partialorder %v1433, %v2196
        %vm2205 = vcmp.gt.f32.partialorder %v1434, %v2196
        %vm2206 = vcmp.gt.f32.partialorder %v1435, %v2198
        %vm2207 = vcmp.gt.f32.partialorder %v1436, %v2198
        %vm2208 = vcmp.gt.f32.partialorder %v1437, %v2200
        %vm2209 = vcmp.gt.f32.partialorder %v1438, %v2200
        %vm2210 = vmand %vm2184, %vm2204
        %vm2211 = vmand %vm2185, %vm2205
        %vm2212 = vmand %vm2186, %vm2206
        %vm2213 = vmand %vm2187, %vm2207
        %vm2214 = vmand %vm2188, %vm2208
        %vm2215 = vmand %vm2189, %vm2209
        %vm2216 = vmand %vm2011, %vm1929
        %vm2217 = vmand %vm2012, %vm1930
        %vm2218 = vmand %vm2013, %vm1931
        %vm2219 = vmand %vm2014, %vm1932
        %vm2220 = vmand %vm2015, %vm1933
        %vm2221 = vmand %vm2016, %vm1934
        %vm2222 = vmxor %vm2210, 1
        %vm2223 = vmxor %vm2211, 1
        %vm2224 = vmxor %vm2212, 1
        %vm2225 = vmxor %vm2213, 1
        %vm2226 = vmxor %vm2214, 1
        %vm2227 = vmxor %vm2215, 1
        %v2228 = vsel %vm2222, 1, 0
        %v2229 = vsel %vm2223, 1, 0
        %v2230 = vsel %vm2224, 1, 0
        %v2231 = vsel %vm2225, 1, 0
        %v2232 = vsel %vm2226, 1, 0
        %v2233 = vsel %vm2227, 1, 0
        %2234 = vrot.lane.b32.xlu0 %v2228, 10
        %v2235 = vpop.permute.xlu0 %2234
        %2236 = vrot.lane.b32.xlu0 %v2229, 10
        %v2237 = vpop.permute.xlu0 %2236
        %2238 = vrot.lane.b32.xlu0 %v2230, 10
        %v2239 = vpop.permute.xlu0 %2238
        %2240 = vrot.lane.b32.xlu0 %v2231, 10
        %v2241 = vpop.permute.xlu0 %2240
        %2242 = vrot.lane.b32.xlu0 %v2232, 10
        %v2243 = vpop.permute.xlu0 %2242
        %2244 = vrot.lane.b32.xlu0 %v2233, 10
        %v2245 = vpop.permute.xlu0 %2244
        %v2246 = vsel %vm2114, %v2235, %v2237
        %v2247 = vsel %vm2114, %v2239, %v2241
        %v2248 = vsel %vm2114, %v2243, %v2245
        %vm2249 = vcmp.ne.s32.totalorder %v2235, 0
        %vm2250 = vcmp.ne.s32.totalorder %v2246, 0
        %vm2251 = vcmp.ne.s32.totalorder %v2239, 0
        %vm2252 = vcmp.ne.s32.totalorder %v2247, 0
        %vm2253 = vcmp.ne.s32.totalorder %v2243, 0
        %vm2254 = vcmp.ne.s32.totalorder %v2248, 0
        %vm2255 = vmand %vm2216, %vm2249
        %vm2256 = vmand %vm2217, %vm2250
        %vm2257 = vmand %vm2218, %vm2251
        %vm2258 = vmand %vm2219, %vm2252
        %vm2259 = vmand %vm2220, %vm2253
        %vm2260 = vmand %vm2221, %vm2254
        %v2261 = vsel %vm2255, 0.0, %v2151
        %v2262 = vsel %vm2256, 0.0, %v2152
        %v2263 = vsel %vm2257, 0.0, %v2153
        %v2264 = vsel %vm2258, 0.0, %v2154
        %v2265 = vsel %vm2259, 0.0, %v2155
        %v2266 = vsel %vm2260, 0.0, %v2156
        %vm2273 = vcmp.gt.f32.partialorder %v1433, %v2157
        %vm2274 = vcmp.gt.f32.partialorder %v1434, %v2158
        %vm2275 = vcmp.gt.f32.partialorder %v1435, %v2160
        %vm2276 = vcmp.gt.f32.partialorder %v1436, %v2162
        %vm2277 = vcmp.gt.f32.partialorder %v1437, %v2159
        %vm2278 = vcmp.gt.f32.partialorder %v1438, %v2161
        %v2279 = vrot.slane %v1434, 1
        %v2280 = vrot.slane %v1436, 1
        %v2281 = vsel %vm462, %v2279, %v2280
        %v2282 = vrot.slane %v1438, 1
        %v2283 = vsel %vm462, %v2280, %v2282
        %vm2290 = vcmp.gt.f32.partialorder %v1433, %v2192
        %vm2291 = vcmp.gt.f32.partialorder %v1434, %v2281
        %vm2292 = vcmp.gt.f32.partialorder %v1435, %v2194
        %vm2293 = vcmp.gt.f32.partialorder %v1436, %v2283
        %vm2294 = vcmp.gt.f32.partialorder %v1437, %v2193
        %vm2295 = vcmp.gt.f32.partialorder %v1438, %v2282
        %vm2296 = vmand %vm2273, %vm2290
        %vm2297 = vmand %vm2274, %vm2291
        %vm2298 = vmand %vm2275, %vm2292
        %vm2299 = vmand %vm2276, %vm2293
        %vm2300 = vmand %vm2277, %vm2294
        %vm2301 = vmand %vm2278, %vm2295
        %v2302 = vsel %vm1733, 1, 0
        %v2303 = vsel %vm1734, 1, 0
        %v2304 = vsel %vm1735, 1, 0
        %v2305 = vsel %vm1736, 1, 0
        %v2306 = vsel %vm1737, 1, 0
        %v2307 = vsel %vm1738, 1, 0
        %v2308 = vrot.slane %v2302, 2
        %v2309 = vrot.slane %v2304, 2
        %v2310 = vsel %vm420, %v2308, %v2309
        %v2311 = vrot.slane %v2303, 2
        %v2312 = vrot.slane %v2305, 2
        %v2313 = vsel %vm420, %v2311, %v2312
        %v2314 = vrot.slane %v2306, 2
        %v2315 = vsel %vm420, %v2309, %v2314
        %v2316 = vrot.slane %v2307, 2
        %v2317 = vsel %vm420, %v2312, %v2316
        %2318 = vrot.lane.b32.xlu0 %v2310, 2
        %v2319 = vpop.permute.xlu0 %2318
        %2320 = vrot.lane.b32.xlu0 %v2313, 2
        %v2321 = vpop.permute.xlu0 %2320
        %2322 = vrot.lane.b32.xlu0 %v2315, 2
        %v2323 = vpop.permute.xlu0 %2322
        %2324 = vrot.lane.b32.xlu0 %v2317, 2
        %v2325 = vpop.permute.xlu0 %2324
        %2326 = vrot.lane.b32.xlu0 %v2314, 2
        %v2327 = vpop.permute.xlu0 %2326
        %2328 = vrot.lane.b32.xlu0 %v2316, 2
        %v2329 = vpop.permute.xlu0 %2328
        %v2330 = vsel %vm1070, %v2319, %v2321
        %v2331 = vsel %vm1070, %v2323, %v2325
        %v2332 = vsel %vm1070, %v2327, %v2329
        %vm2333 = vcmp.ne.s32.totalorder %v2319, 0
        %vm2334 = vcmp.ne.s32.totalorder %v2330, 0
        %vm2335 = vcmp.ne.s32.totalorder %v2323, 0
        %vm2336 = vcmp.ne.s32.totalorder %v2331, 0
        %vm2337 = vcmp.ne.s32.totalorder %v2327, 0
        %vm2338 = vcmp.ne.s32.totalorder %v2332, 0
        %vm2339 = vmand %vm2011, %vm2333
        %vm2340 = vmand %vm2012, %vm2334
        %vm2341 = vmand %vm2013, %vm2335
        %vm2342 = vmand %vm2014, %vm2336
        %vm2343 = vmand %vm2015, %vm2337
        %vm2344 = vmand %vm2016, %vm2338
        %vm2345 = vmxor %vm2296, 1
        %vm2346 = vmxor %vm2297, 1
        %vm2347 = vmxor %vm2298, 1
        %vm2348 = vmxor %vm2299, 1
        %vm2349 = vmxor %vm2300, 1
        %vm2350 = vmxor %vm2301, 1
        %v2351 = vsel %vm2345, 1, 0
        %v2352 = vsel %vm2346, 1, 0
        %v2353 = vsel %vm2347, 1, 0
        %v2354 = vsel %vm2348, 1, 0
        %v2355 = vsel %vm2349, 1, 0
        %v2356 = vsel %vm2350, 1, 0
        %2357 = vrot.lane.b32.xlu0 %v2351, 10
        %v2358 = vpop.permute.xlu0 %2357
        %2359 = vrot.lane.b32.xlu0 %v2352, 10
        %v2360 = vpop.permute.xlu0 %2359
        %2361 = vrot.lane.b32.xlu0 %v2353, 10
        %v2362 = vpop.permute.xlu0 %2361
        %2363 = vrot.lane.b32.xlu0 %v2354, 10
        %v2364 = vpop.permute.xlu0 %2363
        %2365 = vrot.lane.b32.xlu0 %v2355, 10
        %v2366 = vpop.permute.xlu0 %2365
        %2367 = vrot.lane.b32.xlu0 %v2356, 10
        %v2368 = vpop.permute.xlu0 %2367
        %v2369 = vsel %vm2114, %v2358, %v2360
        %v2370 = vsel %vm2114, %v2362, %v2364
        %v2371 = vsel %vm2114, %v2366, %v2368
        %vm2372 = vcmp.ne.s32.totalorder %v2358, 0
        %vm2373 = vcmp.ne.s32.totalorder %v2369, 0
        %vm2374 = vcmp.ne.s32.totalorder %v2362, 0
        %vm2375 = vcmp.ne.s32.totalorder %v2370, 0
        %vm2376 = vcmp.ne.s32.totalorder %v2366, 0
        %vm2377 = vcmp.ne.s32.totalorder %v2371, 0
        %vm2378 = vmand %vm2339, %vm2372
        %vm2379 = vmand %vm2340, %vm2373
        %vm2380 = vmand %vm2341, %vm2374
        %vm2381 = vmand %vm2342, %vm2375
        %vm2382 = vmand %vm2343, %vm2376
        %vm2383 = vmand %vm2344, %vm2377
        %v2384 = vsel %vm2378, 0.0, %v2261
        %v2385 = vsel %vm2379, 0.0, %v2262
        %v2386 = vsel %vm2380, 0.0, %v2263
        %v2387 = vsel %vm2381, 0.0, %v2264
        %v2388 = vsel %vm2382, 0.0, %v2265
        %v2389 = vsel %vm2383, 0.0, %v2266
        %2390 = vrot.lane.b32.xlu0 %v2157, 1
        %v2391 = vpop.permute.xlu0 %2390
        %2392 = vrot.lane.b32.xlu0 %v2160, 1
        %v2393 = vpop.permute.xlu0 %2392
        %2394 = vrot.lane.b32.xlu0 %v2159, 1
        %v2395 = vpop.permute.xlu0 %2394
        %vm2399 = vcmp.gt.f32.partialorder %v1433, %v2391
        %vm2400 = vcmp.gt.f32.partialorder %v1434, %v2391
        %vm2401 = vcmp.gt.f32.partialorder %v1435, %v2393
        %vm2402 = vcmp.gt.f32.partialorder %v1436, %v2393
        %vm2403 = vcmp.gt.f32.partialorder %v1437, %v2395
        %vm2404 = vcmp.gt.f32.partialorder %v1438, %v2395
        %2405 = vrot.lane.b32.xlu0 %v2192, 127
        %v2406 = vpop.permute.xlu0 %2405
        %2407 = vrot.lane.b32.xlu0 %v2281, 127
        %v2408 = vpop.permute.xlu0 %2407
        %2409 = vrot.lane.b32.xlu0 %v2194, 127
        %v2410 = vpop.permute.xlu0 %2409
        %2411 = vrot.lane.b32.xlu0 %v2283, 127
        %v2412 = vpop.permute.xlu0 %2411
        %2413 = vrot.lane.b32.xlu0 %v2193, 127
        %v2414 = vpop.permute.xlu0 %2413
        %2415 = vrot.lane.b32.xlu0 %v2282, 127
        %v2416 = vpop.permute.xlu0 %2415
        %v2417 = vsel %vm396, %v2406, %v2408
        %v2418 = vsel %vm396, %v2410, %v2412
        %v2419 = vsel %vm396, %v2414, %v2416
        %vm2426 = vcmp.gt.f32.partialorder %v1433, %v2417
        %vm2427 = vcmp.gt.f32.partialorder %v1434, %v2408
        %vm2428 = vcmp.gt.f32.partialorder %v1435, %v2418
        %vm2429 = vcmp.gt.f32.partialorder %v1436, %v2412
        %vm2430 = vcmp.gt.f32.partialorder %v1437, %v2419
        %vm2431 = vcmp.gt.f32.partialorder %v1438, %v2416
        %vm2432 = vmand %vm2399, %vm2426
        %vm2433 = vmand %vm2400, %vm2427
        %vm2434 = vmand %vm2401, %vm2428
        %vm2435 = vmand %vm2402, %vm2429
        %vm2436 = vmand %vm2403, %vm2430
        %vm2437 = vmand %vm2404, %vm2431
        %vm2438 = vmand %vm2011, %vm1959
        %vm2439 = vmand %vm2012, %vm1960
        %vm2440 = vmand %vm2013, %vm1961
        %vm2441 = vmand %vm2014, %vm1962
        %vm2442 = vmand %vm2015, %vm1963
        %vm2443 = vmand %vm2016, %vm1964
        %vm2444 = vmxor %vm2432, 1
        %vm2445 = vmxor %vm2433, 1
        %vm2446 = vmxor %vm2434, 1
        %vm2447 = vmxor %vm2435, 1
        %vm2448 = vmxor %vm2436, 1
        %vm2449 = vmxor %vm2437, 1
        %v2450 = vsel %vm2444, 1, 0
        %v2451 = vsel %vm2445, 1, 0
        %v2452 = vsel %vm2446, 1, 0
        %v2453 = vsel %vm2447, 1, 0
        %v2454 = vsel %vm2448, 1, 0
        %v2455 = vsel %vm2449, 1, 0
        %2456 = vrot.lane.b32.xlu0 %v2450, 10
        %v2457 = vpop.permute.xlu0 %2456
        %2458 = vrot.lane.b32.xlu0 %v2451, 10
        %v2459 = vpop.permute.xlu0 %2458
        %2460 = vrot.lane.b32.xlu0 %v2452, 10
        %v2461 = vpop.permute.xlu0 %2460
        %2462 = vrot.lane.b32.xlu0 %v2453, 10
        %v2463 = vpop.permute.xlu0 %2462
        %2464 = vrot.lane.b32.xlu0 %v2454, 10
        %v2465 = vpop.permute.xlu0 %2464
        %2466 = vrot.lane.b32.xlu0 %v2455, 10
        %v2467 = vpop.permute.xlu0 %2466
        %v2468 = vsel %vm2114, %v2457, %v2459
        %v2469 = vsel %vm2114, %v2461, %v2463
        %v2470 = vsel %vm2114, %v2465, %v2467
        %vm2471 = vcmp.ne.s32.totalorder %v2457, 0
        %vm2472 = vcmp.ne.s32.totalorder %v2468, 0
        %vm2473 = vcmp.ne.s32.totalorder %v2461, 0
        %vm2474 = vcmp.ne.s32.totalorder %v2469, 0
        %vm2475 = vcmp.ne.s32.totalorder %v2465, 0
        %vm2476 = vcmp.ne.s32.totalorder %v2470, 0
        %vm2477 = vmand %vm2438, %vm2471
        %vm2478 = vmand %vm2439, %vm2472
        %vm2479 = vmand %vm2440, %vm2473
        %vm2480 = vmand %vm2441, %vm2474
        %vm2481 = vmand %vm2442, %vm2475
        %vm2482 = vmand %vm2443, %vm2476
        %v2483 = vsel %vm2477, 0.0, %v2384
        %v2484 = vsel %vm2478, 0.0, %v2385
        %v2485 = vsel %vm2479, 0.0, %v2386
        %v2486 = vsel %vm2480, 0.0, %v2387
        %v2487 = vsel %vm2481, 0.0, %v2388
        %v2488 = vsel %vm2482, 0.0, %v2389
        %2495 = vrot.lane.b32.xlu0 %v2483, 117
        %v2496 = vpop.permute.xlu0 %2495
        %2497 = vrot.lane.b32.xlu0 %v2484, 117
        %v2498 = vpop.permute.xlu0 %2497
        %2499 = vrot.lane.b32.xlu0 %v2485, 117
        %v2500 = vpop.permute.xlu0 %2499
        %2501 = vrot.lane.b32.xlu0 %v2486, 117
        %v2502 = vpop.permute.xlu0 %2501
        %2503 = vrot.lane.b32.xlu0 %v2487, 117
        %v2504 = vpop.permute.xlu0 %2503
        %2505 = vrot.lane.b32.xlu0 %v2488, 117
        %v2506 = vpop.permute.xlu0 %2505
        %v2507 = vsel %vm1244, %v2496, %v2498
        %v2508 = vsel %vm1244, %v2500, %v2502
        %v2509 = vsel %vm1244, %v2504, %v2506
        %2513 = vst [vmem:[%s277 - $0x1] sm:$0xfe] %v2507
        %2514 = vst [vmem:[%s277 + $0x7] sm:$0xff] %v2508
        %2515 = vst [vmem:[%s277 + $0xf] sm:$0x1] %v2509
        %s2516 = sand.u32 %s63, 1
        %s2517 = scalar_lea.sflag [#allocation4], %s2516
        %s2518 = sand.u32 %s63, 1
        %s2519 = smul.addr %s2518, 160
        %s2520 = scalar_lea.vmem [#allocation5], %s2519
        %s2521 = sand.u32 %s29, 1
        %s2522 = scalar_lea.sflag [#allocation7], %s2521
        %s2523 = sand.u32 %s89, 1
        %s2524 = smul.addr %s2523, 16
        %s2525 = scalar_lea.vmem [#allocation6], %s2524
        %s2526 = sand.u32 %s29, 1
        %s2527 = scalar_lea.sflag [#allocation7], %s2526
        %s2528 = sand.u32 %s115, 1
        %s2529 = smul.addr %s2528, 16
        %s2530 = scalar_lea.vmem [#allocation8], %s2529
        %s2531 = sand.u32 %s29, 1
        %s2532 = scalar_lea.sflag [#allocation10], %s2531
        %s2533 = sand.u32 %s141, 1
        %s2534 = smul.addr %s2533, 16
        %s2535 = scalar_lea.vmem [#allocation9], %s2534
        %s2536 = sand.u32 %s29, 1
        %s2537 = scalar_lea.sflag [#allocation10], %s2536
        %s2538 = sand.u32 %s167, 1
        %s2539 = smul.addr %s2538, 16
        %s2540 = scalar_lea.vmem [#allocation11], %s2539
        // Predicated region
        $region29: #{canny_forward.1} parent=23 // pred_check
          %p2541 = pneg %p73
        $region30: #{canny_forward.1} parent=23 // pred_check_branch
          %2543 = sbr.rel (%p2541) target = $region32
        $region31: #{canny_forward.1} parent=23 // pred_region
          %s2545 = ssub.s32 2560, 2560
          %2546 = vsyncadd %s2517, %s2545
          %s2547 = smul.addr %s29, 20
          %s2548 = smul.addr %s2547, 128
          %s2549 = scalar_lea.hbm %s1, %s2548
          %s2550 = sshll.u32 %s2520, 4
          %s2551 = int_to_ptr.vmem [resolvable:$true] %s2550
          %2556 = dma.vmem_to_hbm [thread:$0]  %s2551, 2560, %s2549, %s2517, 128, 128, 8
        $region32: #{canny_forward.1} parent=23 // pred_fallthru
          _
        // Predicated region
        $region33: #{canny_forward.1} parent=23 // pred_check
          %p2557 = pneg %p99
        $region34: #{canny_forward.1} parent=23 // pred_check_branch
          %2559 = sbr.rel (%p2557) target = $region36
        $region35: #{canny_forward.1} parent=23 // pred_region
          %s2561 = ssub.s32 256, 256
          %2562 = vsyncadd %s2522, %s2561
          %s2563 = smul.addr %s29, 2
          %s2564 = smul.addr %s2563, 128
          %s2565 = scalar_lea.hbm %s2, %s2564
          %s2566 = sshll.u32 %s2525, 4
          %s2567 = int_to_ptr.vmem [resolvable:$true] %s2566
          %2572 = dma.vmem_to_hbm [thread:$0]  %s2567, 256, %s2565, %s2522, 128, 128, 8
        $region36: #{canny_forward.1} parent=23 // pred_fallthru
          _
        // Predicated region
        $region37: #{canny_forward.1} parent=23 // pred_check
          %p2573 = pneg %p125
        $region38: #{canny_forward.1} parent=23 // pred_check_branch
          %2575 = sbr.rel (%p2573) target = $region40
        $region39: #{canny_forward.1} parent=23 // pred_region
          %s2577 = ssub.s32 256, 256
          %2578 = vsyncadd %s2527, %s2577
          %s2579 = smul.addr %s29, 2
          %s2580 = smul.addr %s2579, 128
          %s2581 = scalar_lea.hbm %s3, %s2580
          %s2582 = sshll.u32 %s2530, 4
          %s2583 = int_to_ptr.vmem [resolvable:$true] %s2582
          %2588 = dma.vmem_to_hbm [thread:$0]  %s2583, 256, %s2581, %s2527, 128, 128, 8
        $region40: #{canny_forward.1} parent=23 // pred_fallthru
          _
        // Predicated region
        $region41: #{canny_forward.1} parent=23 // pred_check
          %p2589 = pneg %p151
        $region42: #{canny_forward.1} parent=23 // pred_check_branch
          %2591 = sbr.rel (%p2589) target = $region44
        $region43: #{canny_forward.1} parent=23 // pred_region
          %s2593 = ssub.s32 256, 256
          %2594 = vsyncadd %s2532, %s2593
          %s2595 = smul.addr %s29, 2
          %s2596 = smul.addr %s2595, 128
          %s2597 = scalar_lea.hbm %s4, %s2596
          %s2598 = sshll.u32 %s2535, 4
          %s2599 = int_to_ptr.vmem [resolvable:$true] %s2598
          %2604 = dma.vmem_to_hbm [thread:$0]  %s2599, 256, %s2597, %s2532, 128, 128, 8
        $region44: #{canny_forward.1} parent=23 // pred_fallthru
          _
        // Predicated region
        $region45: #{canny_forward.1} parent=23 // pred_check
          %p2605 = pneg %p177
        $region46: #{canny_forward.1} parent=23 // pred_check_branch
          %2607 = sbr.rel (%p2605) target = $region48
        $region47: #{canny_forward.1} parent=23 // pred_region
          %s2609 = ssub.s32 256, 256
          %2610 = vsyncadd %s2537, %s2609
          %s2611 = smul.addr %s29, 2
          %s2612 = smul.addr %s2611, 128
          %s2613 = scalar_lea.hbm %s5, %s2612
          %s2614 = sshll.u32 %s2540, 4
          %s2615 = int_to_ptr.vmem [resolvable:$true] %s2614
          %2620 = dma.vmem_to_hbm [thread:$0]  %s2615, 256, %s2613, %s2537, 128, 128, 8
        $region48: #{canny_forward.1} parent=23 // pred_fallthru
          _
      $region24: #{canny_forward.1} parent=5 // pred_fallthru
        _
      %p2621 = scmp.le.s32.totalorder 2, %s24
      // Predicated region
      $region49: #{canny_forward.1} parent=5 // pred_check
        %p2622 = pneg %p2621
      $region50: #{canny_forward.1} parent=5 // pred_check_branch
        %2624 = sbr.rel (%p2622) target = $region52
      $region51: #{canny_forward.1} parent=5 // pred_region
        %s2625 = ssub.s32 %s24, 2
        // Predicated region
        $region53: #{canny_forward.1} parent=51 // pred_check
          %p2626 = pneg %p79
        $region54: #{canny_forward.1} parent=51 // pred_check_branch
          %2628 = sbr.rel (%p2626) target = $region56
        $region55: #{canny_forward.1} parent=51 // pred_region
          %s2629 = sand.u32 %s64, 1
          %s2630 = scalar_lea.sflag [#allocation4], %s2629
          %s2631 = sand.u32 %s64, 1
          %s2632 = smul.addr %s2631, 160
          %s2633 = scalar_lea.vmem [#allocation5], %s2632
          %2634 = dma.done %s2630, 2560
        $region56: #{canny_forward.1} parent=51 // pred_fallthru
          _
        // Predicated region
        $region57: #{canny_forward.1} parent=51 // pred_check
          %p2635 = pneg %p105
        $region58: #{canny_forward.1} parent=51 // pred_check_branch
          %2637 = sbr.rel (%p2635) target = $region60
        $region59: #{canny_forward.1} parent=51 // pred_region
          %s2638 = sand.u32 %s30, 1
          %s2639 = scalar_lea.sflag [#allocation7], %s2638
          %s2640 = sand.u32 %s90, 1
          %s2641 = smul.addr %s2640, 16
          %s2642 = scalar_lea.vmem [#allocation6], %s2641
          %2643 = dma.done %s2639, 256
        $region60: #{canny_forward.1} parent=51 // pred_fallthru
          _
        // Predicated region
        $region61: #{canny_forward.1} parent=51 // pred_check
          %p2644 = pneg %p131
        $region62: #{canny_forward.1} parent=51 // pred_check_branch
          %2646 = sbr.rel (%p2644) target = $region64
        $region63: #{canny_forward.1} parent=51 // pred_region
          %s2647 = sand.u32 %s30, 1
          %s2648 = scalar_lea.sflag [#allocation7], %s2647
          %s2649 = sand.u32 %s116, 1
          %s2650 = smul.addr %s2649, 16
          %s2651 = scalar_lea.vmem [#allocation8], %s2650
          %2652 = dma.done %s2648, 256
        $region64: #{canny_forward.1} parent=51 // pred_fallthru
          _
        // Predicated region
        $region65: #{canny_forward.1} parent=51 // pred_check
          %p2653 = pneg %p157
        $region66: #{canny_forward.1} parent=51 // pred_check_branch
          %2655 = sbr.rel (%p2653) target = $region68
        $region67: #{canny_forward.1} parent=51 // pred_region
          %s2656 = sand.u32 %s30, 1
          %s2657 = scalar_lea.sflag [#allocation10], %s2656
          %s2658 = sand.u32 %s142, 1
          %s2659 = smul.addr %s2658, 16
          %s2660 = scalar_lea.vmem [#allocation9], %s2659
          %2661 = dma.done %s2657, 256
        $region68: #{canny_forward.1} parent=51 // pred_fallthru
          _
        // Predicated region
        $region69: #{canny_forward.1} parent=51 // pred_check
          %p2662 = pneg %p183
        $region70: #{canny_forward.1} parent=51 // pred_check_branch
          %2664 = sbr.rel (%p2662) target = $region72
        $region71: #{canny_forward.1} parent=51 // pred_region
          %s2665 = sand.u32 %s30, 1
          %s2666 = scalar_lea.sflag [#allocation10], %s2665
          %s2667 = sand.u32 %s168, 1
          %s2668 = smul.addr %s2667, 16
          %s2669 = scalar_lea.vmem [#allocation11], %s2668
          %2670 = dma.done %s2666, 256
        $region72: #{canny_forward.1} parent=51 // pred_fallthru
          _
      $region52: #{canny_forward.1} parent=5 // pred_fallthru
        _
    $region6: #{canny_forward.1} parent=1 // loop_footer
      %s28 = sadd.s32 1, %s24
    $region7: #{canny_forward.1} parent=1 // loop_footer_branch
      %23 = sbr.rel target = $region3
    $region8: #{canny_forward.1} parent=1 // loop_exit
      _
    %2671 = vsyncpa [#allocation3], 1
    %s2672 = scalar_lea.sflag [#allocation3], 1
    %2673 = vsyncpa %s2672, 1
    %2674 = vsyncpa [#allocation4], 1
    %s2675 = scalar_lea.sflag [#allocation4], 1
    %2676 = vsyncpa %s2675, 1
    %2677 = vsyncpa [#allocation7], 1
    %s2678 = scalar_lea.sflag [#allocation7], 1
    %2679 = vsyncpa %s2678, 1
    %2680 = vsyncpa [#allocation10], 1
    %s2681 = scalar_lea.sflag [#allocation10], 1
    %2682 = vsyncpa %s2681, 1

</llo_original>
